<compile_context>
chip_gen: v7x
topology: tpu7x:2x2x1
jax: 0.10.0
libtpu: 0.0.40
codegen_flags: <defaults>
</compile_context>

<pallas_src>
import jax
import jax.numpy as jnp
from jax.experimental import pallas as pl
from jax.experimental.pallas import tpu as pltpu

IN_DIM = 28 * 28          # 784; streamed un-padded (full-last-dim BlockSpec, ragged K on MXU)
H1 = 512
H2 = 256
OUT_DIM = 1               # logical output width
OUT_PAD = 128             # lane-dense final-layer width (sliced back to 1 in the wrapper)
NEG_SLOPE = 0.01          # PyTorch nn.LeakyReLU default
MAX_TILE = 1024           # batch tile; ~15 MiB VMEM -> fits v5e/v6e/v7x with the limit below
VMEM_LIMIT = 32 * 1024 * 1024


def _round_up(n, m):
    return ((n + m - 1) // m) * m


def _leaky_relu(x):
    return jnp.where(x > 0, x, NEG_SLOPE * x)


def _stable_sigmoid(x):
    """Numerically stable sigmoid: exp of a non-positive argument only.
    exp + reciprocal both go to the EUP slot (approx reciprocal)."""
    z = jnp.exp(-jnp.abs(x))
    r = pl.reciprocal(1.0 + z, approx=True)
    return jnp.where(x >= 0, r, z * r)


def disc_kernel(x_ref, w1_ref, b1_ref, w2_ref, b2_ref, w3_ref, b3_ref, o_ref):
    """Whole MLP forward for one (TB, 784) f32 batch tile.
    3 MXU matmuls (bf16 operands, f32 accumulation) + VPU LeakyReLU + EUP sigmoid."""
    x = x_ref[...].astype(jnp.bfloat16)                                # (TB, 784) bf16 (in-kernel cast)

    h1 = jnp.dot(x, w1_ref[...], preferred_element_type=jnp.float32)  # (TB, 512) f32
    h1 = _leaky_relu(h1 + b1_ref[...])

    h2 = jnp.dot(h1.astype(jnp.bfloat16), w2_ref[...],
                 preferred_element_type=jnp.float32)                  # (TB, 256) f32
    h2 = _leaky_relu(h2 + b2_ref[...])

    h3 = jnp.dot(h2.astype(jnp.bfloat16), w3_ref[...],
                 preferred_element_type=jnp.float32)                  # (TB, 128) f32
    h3 = h3 + b3_ref[...]

    # Lane-dense 128-wide store; bf16 halves the (mostly padded) output stream.
    o_ref[...] = _stable_sigmoid(h3).astype(o_ref.dtype)


def init_params(key):
    """Deterministic init mimicking PyTorch Linear default (uniform +-1/sqrt(fan_in)).
    Weights stored as (in, out) bf16; only the last layer's output dim is padded
    1 -> 128 for a lane-dense final matmul/store. Biases stay f32."""
    ks = jax.random.split(key, 6)

    def lin(kw, kb, fan_in, fan_out, pad_out=None):
        pad_out = fan_out if pad_out is None else pad_out
        bound = float(fan_in) ** -0.5
        w = jax.random.uniform(kw, (fan_in, fan_out), jnp.float32, -bound, bound)
        b = jax.random.uniform(kb, (1, fan_out), jnp.float32, -bound, bound)
        w = jnp.pad(w, ((0, 0), (0, pad_out - fan_out)))
        b = jnp.pad(b, ((0, 0), (0, pad_out - fan_out)))
        return w.astype(jnp.bfloat16), b

    w1, b1 = lin(ks[0], ks[1], IN_DIM, H1)
    w2, b2 = lin(ks[2], ks[3], H1, H2)
    w3, b3 = lin(ks[4], ks[5], H2, OUT_DIM, OUT_PAD)
    return w1, b1, w2, b2, w3, b3


def discrimination_forward(x, params, *, max_tile=MAX_TILE):
    """x: any shape reshapable to (B, 784) (e.g. NCHW (B,1,28,28)).
    Returns (B, 1) float32 in (0, 1)."""
    w1, b1, w2, b2, w3, b3 = params

    # Contiguous reshape only -- no padded/bf16 materialization pass over x.
    x2 = x.reshape(-1, IN_DIM).astype(jnp.float32)
    B = x2.shape[0]

    # Batch tile: multiple of 16 rows, capped at max_tile; when the batch is
    # large enough keep >= 2 grid steps so both v7x TensorCores get work.
    TB = min(max_tile, _round_up(B, 16))
    if B >= 32:
        TB = min(TB, _round_up(pl.cdiv(B, 2), 16))
    B_pad = _round_up(B, TB)
    if B_pad != B:
        x2 = jnp.pad(x2, ((0, B_pad - B), (0, 0)))

    grid = (B_pad // TB,)

    weight_bytes = 2 * (IN_DIM * H1 + H1 * H2 + H2 * OUT_PAD) + 4 * (H1 + H2 + OUT_PAD)
    cost = pl.CostEstimate(
        flops=2 * B_pad * (IN_DIM * H1 + H1 * H2 + H2 * OUT_PAD),
        transcendentals=2 * B_pad * OUT_PAD,                 # exp + approx reciprocal
        bytes_accessed=B_pad * IN_DIM * 4 + weight_bytes + B_pad * OUT_PAD * 2,
    )

    out = pl.pallas_call(
        disc_kernel,
        out_shape=jax.ShapeDtypeStruct((B_pad, OUT_PAD), jnp.bfloat16),
        grid_spec=pltpu.PrefetchScalarGridSpec(
            num_scalar_prefetch=0,
            grid=grid,
            in_specs=[
                pl.BlockSpec((TB, IN_DIM), lambda i: (i, 0)),    # x tile (pipelined), full-K
                pl.BlockSpec((IN_DIM, H1), lambda i: (0, 0)),    # w1 (VMEM-resident)
                pl.BlockSpec((1, H1), lambda i: (0, 0)),         # b1
                pl.BlockSpec((H1, H2), lambda i: (0, 0)),        # w2
                pl.BlockSpec((1, H2), lambda i: (0, 0)),         # b2
                pl.BlockSpec((H2, OUT_PAD), lambda i: (0, 0)),   # w3 (padded cols)
                pl.BlockSpec((1, OUT_PAD), lambda i: (0, 0)),    # b3 (padded)
            ],
            out_specs=pl.BlockSpec((TB, OUT_PAD), lambda i: (i, 0)),
        ),
        compiler_params=pltpu.CompilerParams(
            dimension_semantics=("parallel",),
            vmem_limit_bytes=VMEM_LIMIT,
        ),
        cost_estimate=cost,
    )(x2, w1, b1, w2, b2, w3, b3)

    # Drop batch padding + the lane padding of the final layer; return f32.
    return out[:B, :OUT_DIM].astype(jnp.float32)


def _reference_bf16(x, params):
    """Plain-JAX reference mirroring the kernel's bf16-operand / f32-accumulation
    numerics and bf16 output store (tight self-consistency check)."""
    w1, b1, w2, b2, w3, b3 = params
    h = x.reshape(-1, IN_DIM).astype(jnp.bfloat16)
    h = jnp.dot(h, w1, preferred_element_type=jnp.float32) + b1
    h = _leaky_relu(h).astype(jnp.bfloat16)
    h = jnp.dot(h, w2, preferred_element_type=jnp.float32) + b2
    h = _leaky_relu(h).astype(jnp.bfloat16)
    h = jnp.dot(h, w3, preferred_element_type=jnp.float32) + b3
    out = jax.nn.sigmoid(h)[:, :OUT_DIM]
    return out.astype(jnp.bfloat16).astype(jnp.float32)


def _reference_f32(x, params):
    """Full-f32 forward matching the PyTorch module semantics (fidelity check;
    loose tolerance vs the bf16-operand kernel)."""
    w1, b1, w2, b2, w3, b3 = params
    h = x.reshape(-1, IN_DIM).astype(jnp.float32)
    h = _leaky_relu(jnp.dot(h, w1.astype(jnp.float32)) + b1)
    h = _leaky_relu(jnp.dot(h, w2.astype(jnp.float32)) + b2)
    h = jnp.dot(h, w3.astype(jnp.float32)) + b3
    return jax.nn.sigmoid(h)[:, :OUT_DIM]


if __name__ == "__main__":
    key = jax.random.PRNGKey(0)
    k_param, k_x = jax.random.split(key)

    params = init_params(k_param)
    # Small MNIST-like batch: NCHW (B=2, C=1, H=28, W=28).
    x = jax.random.normal(k_x, (2, 1, 28, 28), dtype=jnp.float32)

    out = jax.block_until_ready(discrimination_forward(x, params))

    ref_bf16 = _reference_bf16(x, params)
    ref_f32 = _reference_f32(x, params)

    assert out.shape == (2, OUT_DIM), out.shape
    assert jnp.all((out > 0.0) & (out < 1.0))
    assert jnp.allclose(out, ref_bf16, atol=1e-2), (out, ref_bf16)   # self-consistency
    assert jnp.allclose(out, ref_f32, atol=3e-2), (out, ref_f32)     # fidelity to f32 module

    print("KERNEL_OK")
</pallas_src>

<mosaic_0001>
module attributes {stable_mosaic.version = 11 : i64} {
  func.func @disc_kernel(%arg0: i32, %arg1: memref<16x784xf32, #tpu.memory_space<vmem>>, %arg2: memref<784x512xbf16, #tpu.memory_space<vmem>>, %arg3: memref<1x512xf32, #tpu.memory_space<vmem>>, %arg4: memref<512x256xbf16, #tpu.memory_space<vmem>>, %arg5: memref<1x256xf32, #tpu.memory_space<vmem>>, %arg6: memref<256x128xbf16, #tpu.memory_space<vmem>>, %arg7: memref<1x128xf32, #tpu.memory_space<vmem>>, %arg8: memref<16x128xbf16, #tpu.memory_space<vmem>>) attributes {dimension_semantics = [#tpu.dimension_semantics<parallel>], iteration_bounds = array<i64: 1>, scalar_prefetch = 0 : i64, scratch_operands = 0 : i64, tpu.core_type = #tpu.core_type<tc>, window_params = [{transform_indices = @transform_0, window_bounds = array<i64: 16, 784>}, {pipeline_mode = #tpu.pipeline_mode<synchronous>, transform_indices = @transform_1, window_bounds = array<i64: 784, 512>}, {pipeline_mode = #tpu.pipeline_mode<synchronous>, transform_indices = @transform_2, window_bounds = array<i64: 1, 512>}, {pipeline_mode = #tpu.pipeline_mode<synchronous>, transform_indices = @transform_3, window_bounds = array<i64: 512, 256>}, {pipeline_mode = #tpu.pipeline_mode<synchronous>, transform_indices = @transform_4, window_bounds = array<i64: 1, 256>}, {pipeline_mode = #tpu.pipeline_mode<synchronous>, transform_indices = @transform_5, window_bounds = array<i64: 256, 128>}, {pipeline_mode = #tpu.pipeline_mode<synchronous>, transform_indices = @transform_6, window_bounds = array<i64: 1, 128>}, {transform_indices = @transform_7, window_bounds = array<i64: 16, 128>}]} {
    %c0 = arith.constant 0 : index
    %c0_0 = arith.constant 0 : index
    %0 = vector.load %arg1[%c0, %c0_0] : memref<16x784xf32, #tpu.memory_space<vmem>>, vector<16x784xf32>
    %1 = arith.truncf %0 : vector<16x784xf32> to vector<16x784xbf16>
    %c0_1 = arith.constant 0 : index
    %c0_2 = arith.constant 0 : index
    %2 = vector.load %arg2[%c0_1, %c0_2] : memref<784x512xbf16, #tpu.memory_space<vmem>>, vector<784x512xbf16>
    %cst = arith.constant dense<0.000000e+00> : vector<16x512xf32>
    %3 = tpu.matmul %1, %2, %cst {dimension_numbers = #tpu.dot_dimension_numbers<[1], [0], [0], [1], [0, 0, 1, 1], [], []>} : vector<16x784xbf16>, vector<784x512xbf16>, vector<16x512xf32> -> vector<16x512xf32>
    %c0_3 = arith.constant 0 : index
    %c0_4 = arith.constant 0 : index
    %4 = vector.load %arg3[%c0_3, %c0_4] : memref<1x512xf32, #tpu.memory_space<vmem>>, vector<1x512xf32>
    %5 = vector.broadcast %4 : vector<1x512xf32> to vector<16x512xf32>
    %6 = arith.addf %3, %5 : vector<16x512xf32>
    %cst_5 = arith.constant 0.000000e+00 : f32
    %7 = vector.broadcast %cst_5 : f32 to vector<16x512xf32>
    %8 = arith.cmpf ogt, %6, %7 : vector<16x512xf32>
    %cst_6 = arith.constant 0.00999999977 : f32
    %9 = vector.broadcast %cst_6 : f32 to vector<16x512xf32>
    %10 = arith.mulf %9, %6 : vector<16x512xf32>
    %11 = arith.select %8, %6, %10 : vector<16x512xi1>, vector<16x512xf32>
    %12 = arith.truncf %11 : vector<16x512xf32> to vector<16x512xbf16>
    %c0_7 = arith.constant 0 : index
    %c0_8 = arith.constant 0 : index
    %13 = vector.load %arg4[%c0_7, %c0_8] : memref<512x256xbf16, #tpu.memory_space<vmem>>, vector<512x256xbf16>
    %cst_9 = arith.constant dense<0.000000e+00> : vector<16x256xf32>
    %14 = tpu.matmul %12, %13, %cst_9 {dimension_numbers = #tpu.dot_dimension_numbers<[1], [0], [0], [1], [0, 0, 1, 1], [], []>} : vector<16x512xbf16>, vector<512x256xbf16>, vector<16x256xf32> -> vector<16x256xf32>
    %c0_10 = arith.constant 0 : index
    %c0_11 = arith.constant 0 : index
    %15 = vector.load %arg5[%c0_10, %c0_11] : memref<1x256xf32, #tpu.memory_space<vmem>>, vector<1x256xf32>
    %16 = vector.broadcast %15 : vector<1x256xf32> to vector<16x256xf32>
    %17 = arith.addf %14, %16 : vector<16x256xf32>
    %cst_12 = arith.constant 0.000000e+00 : f32
    %18 = vector.broadcast %cst_12 : f32 to vector<16x256xf32>
    %19 = arith.cmpf ogt, %17, %18 : vector<16x256xf32>
    %cst_13 = arith.constant 0.00999999977 : f32
    %20 = vector.broadcast %cst_13 : f32 to vector<16x256xf32>
    %21 = arith.mulf %20, %17 : vector<16x256xf32>
    %22 = arith.select %19, %17, %21 : vector<16x256xi1>, vector<16x256xf32>
    %23 = arith.truncf %22 : vector<16x256xf32> to vector<16x256xbf16>
    %c0_14 = arith.constant 0 : index
    %c0_15 = arith.constant 0 : index
    %24 = vector.load %arg6[%c0_14, %c0_15] : memref<256x128xbf16, #tpu.memory_space<vmem>>, vector<256x128xbf16>
    %cst_16 = arith.constant dense<0.000000e+00> : vector<16x128xf32>
    %25 = tpu.matmul %23, %24, %cst_16 {dimension_numbers = #tpu.dot_dimension_numbers<[1], [0], [0], [1], [0, 0, 1, 1], [], []>} : vector<16x256xbf16>, vector<256x128xbf16>, vector<16x128xf32> -> vector<16x128xf32>
    %c0_17 = arith.constant 0 : index
    %c0_18 = arith.constant 0 : index
    %26 = vector.load %arg7[%c0_17, %c0_18] : memref<1x128xf32, #tpu.memory_space<vmem>>, vector<1x128xf32>
    %27 = vector.broadcast %26 : vector<1x128xf32> to vector<16x128xf32>
    %28 = arith.addf %25, %27 : vector<16x128xf32>
    %29 = math.absf %28 : vector<16x128xf32>
    %cst_19 = arith.constant 0.000000e+00 : f32
    %30 = vector.broadcast %cst_19 : f32 to vector<16x128xf32>
    %31 = arith.subf %30, %29 : vector<16x128xf32>
    %32 = math.exp %31 : vector<16x128xf32>
    %cst_20 = arith.constant 1.000000e+00 : f32
    %33 = vector.broadcast %cst_20 : f32 to vector<16x128xf32>
    %34 = arith.addf %33, %32 : vector<16x128xf32>
    %35 = tpu.reciprocal %34 {approx = true} : vector<16x128xf32> -> vector<16x128xf32>
    %cst_21 = arith.constant 0.000000e+00 : f32
    %36 = vector.broadcast %cst_21 : f32 to vector<16x128xf32>
    %37 = arith.cmpf oge, %28, %36 : vector<16x128xf32>
    %38 = arith.mulf %32, %35 : vector<16x128xf32>
    %39 = arith.select %37, %35, %38 : vector<16x128xi1>, vector<16x128xf32>
    %40 = arith.truncf %39 : vector<16x128xf32> to vector<16x128xbf16>
    %c0_22 = arith.constant 0 : index
    %c0_23 = arith.constant 0 : index
    %41 = vector.load %arg8[%c0_22, %c0_23] : memref<16x128xbf16, #tpu.memory_space<vmem>>, vector<16x128xbf16>
    tpu.vector_store %arg8[%c0_22, %c0_23], %40 {strides = array<i32>} : memref<16x128xbf16, #tpu.memory_space<vmem>>, vector<16x128xbf16>,
    return
  }
  func.func @transform_0(%arg0: i32) -> (i32, i32) {
    %c0_i32 = arith.constant 0 : i32
    %c0_i32_0 = arith.constant 0 : i32
    return %arg0, %c0_i32 : i32, i32
  }
  func.func @transform_1(%arg0: i32) -> (i32, i32) {
    %c0_i32 = arith.constant 0 : i32
    %c0_i32_0 = arith.constant 0 : i32
    %c0_i32_1 = arith.constant 0 : i32
    return %c0_i32, %c0_i32_0 : i32, i32
  }
  func.func @transform_2(%arg0: i32) -> (i32, i32) {
    %c0_i32 = arith.constant 0 : i32
    %c0_i32_0 = arith.constant 0 : i32
    %c0_i32_1 = arith.constant 0 : i32
    return %c0_i32, %c0_i32_0 : i32, i32
  }
  func.func @transform_3(%arg0: i32) -> (i32, i32) {
    %c0_i32 = arith.constant 0 : i32
    %c0_i32_0 = arith.constant 0 : i32
    %c0_i32_1 = arith.constant 0 : i32
    return %c0_i32, %c0_i32_0 : i32, i32
  }
  func.func @transform_4(%arg0: i32) -> (i32, i32) {
    %c0_i32 = arith.constant 0 : i32
    %c0_i32_0 = arith.constant 0 : i32
    %c0_i32_1 = arith.constant 0 : i32
    return %c0_i32, %c0_i32_0 : i32, i32
  }
  func.func @transform_5(%arg0: i32) -> (i32, i32) {
    %c0_i32 = arith.constant 0 : i32
    %c0_i32_0 = arith.constant 0 : i32
    %c0_i32_1 = arith.constant 0 : i32
    return %c0_i32, %c0_i32_0 : i32, i32
  }
  func.func @transform_6(%arg0: i32) -> (i32, i32) {
    %c0_i32 = arith.constant 0 : i32
    %c0_i32_0 = arith.constant 0 : i32
    %c0_i32_1 = arith.constant 0 : i32
    return %c0_i32, %c0_i32_0 : i32, i32
  }
  func.func @transform_7(%arg0: i32) -> (i32, i32) {
    %c0_i32 = arith.constant 0 : i32
    %c0_i32_0 = arith.constant 0 : i32
    return %arg0, %c0_i32 : i32, i32
  }
}

</mosaic_0001>

<llo_original>
// kernel: tpu_custom_call.1
$region0: #{tpu_custom_call.1}
  #allocation0 [shape = 'u32[]', space=smem, size = 0x4, offset = 0x4, fixed_abs, tag = 'smem constant byte address 0x4 - core index']
  #allocation1 [shape = 'u32[144,128]{1,0:T(1,128)}', space=vmem, size = 0x12000, scoped, tag = 'internal scratch']
  %s0 = inlined_call_operand.hbm [shape: f32[16,784], index: 0, kind: input, shape index: {}]
  %s1 = inlined_call_operand.hbm [shape: bf16[784,512], index: 1, kind: input, shape index: {}]
  %s2 = inlined_call_operand.vmem [shape: f32[1,512], index: 2, kind: input, shape index: {}]
  %s3 = inlined_call_operand.hbm [shape: bf16[512,256], index: 3, kind: input, shape index: {}]
  %s4 = inlined_call_operand.vmem [shape: f32[1,256], index: 4, kind: input, shape index: {}]
  %s5 = inlined_call_operand.hbm [shape: bf16[256,128], index: 5, kind: input, shape index: {}]
  %s6 = inlined_call_operand.vmem [shape: f32[1,128], index: 6, kind: input, shape index: {}]
  %s7 = inlined_call_operand.hbm [shape: bf16[16,128], index: 7, kind: output, shape index: {}]
  %s8 = sld [smem:[#allocation0]]
  $region54: #{tpu_custom_call.1} parent=0
    _
  %s10 = ssub.s32 1, %s8
  %s11 = scalar_select 0, %s10, %s8
  $region1: #{tpu_custom_call.1} parent=0
    #allocation2 [shape = 'u8[57344]{0}', space=vmem, size = 0xe000, scoped, tag = 'input window, operand 0, single buffered']
    #allocation3 [shape = 's32[1]{0}', space=sflag, size = 0x4, scoped, tag = 'scoped memory for tpu_custom_call.1']
    #allocation4 [shape = 's32[1]{0}', space=sflag, size = 0x4, scoped, tag = 'scoped memory for tpu_custom_call.1']
    #allocation5 [shape = 'u8[802816]{0}', space=vmem, size = 0xc4000, scoped, tag = 'input window, operand 1, single buffered']
    #allocation6 [shape = 's32[1]{0}', space=sflag, size = 0x4, scoped, tag = 'scoped memory for tpu_custom_call.1']
    #allocation7 [shape = 'u8[262144]{0}', space=vmem, size = 0x40000, scoped, tag = 'input window, operand 3, single buffered']
    #allocation8 [shape = 'u8[65536]{0}', space=vmem, size = 0x10000, scoped, tag = 'input window, operand 5, single buffered']
    #allocation9 [shape = 's32[1]{0}', space=sflag, size = 0x4, scoped, tag = 'scoped memory for tpu_custom_call.1']
    #allocation10 [shape = 'u8[4096]{0}', space=vmem, size = 0x1000, scoped, tag = 'output window, operand 0, single buffered']
    %12 = vsyncpa [#allocation3], 0
    %13 = vsyncpa [#allocation6], 0
    %14 = vsyncpa [#allocation9], 0
    %15 = vsyncpa [#allocation4], 0
    // Predicated region
    $region2: #{tpu_custom_call.1} parent=1 // pred_check
      _
    $region3: #{tpu_custom_call.1} parent=1 // pred_check_branch
      %17 = sbr.rel (0) target = $region5
    $region4: #{tpu_custom_call.1} parent=1 // pred_region
      %s19 = ssub.s32 1792, 1792
      %20 = vsyncadd [#allocation3], %s19
      %s21 = sshll.u32 [#allocation2], 4
      %s22 = int_to_ptr.vmem [resolvable:$true] %s21
      %27 = dma.hbm_to_vmem [thread:$0]  %s0, 1792, %s22, [#allocation3], 896, 896, 56
    $region5: #{tpu_custom_call.1} parent=1 // pred_fallthru
      _
    // Predicated region
    $region6: #{tpu_custom_call.1} parent=1 // pred_check
      _
    $region7: #{tpu_custom_call.1} parent=1 // pred_check_branch
      %29 = sbr.rel (0) target = $region9
    $region8: #{tpu_custom_call.1} parent=1 // pred_region
      %s31 = ssub.s32 25088, 25088
      %32 = vsyncadd [#allocation6], %s31
      %s33 = sshll.u32 [#allocation5], 4
      %s34 = int_to_ptr.vmem [resolvable:$true] %s33
      %39 = dma.hbm_to_vmem [thread:$0]  %s1, 25088, %s34, [#allocation6], 256, 256, 16
    $region9: #{tpu_custom_call.1} parent=1 // pred_fallthru
      _
    // Predicated region
    $region10: #{tpu_custom_call.1} parent=1 // pred_check
      _
    $region11: #{tpu_custom_call.1} parent=1 // pred_check_branch
      %41 = sbr.rel (0) target = $region13
    $region12: #{tpu_custom_call.1} parent=1 // pred_region
      _
    $region13: #{tpu_custom_call.1} parent=1 // pred_fallthru
      _
    // Predicated region
    $region14: #{tpu_custom_call.1} parent=1 // pred_check
      _
    $region15: #{tpu_custom_call.1} parent=1 // pred_check_branch
      %43 = sbr.rel (0) target = $region17
    $region16: #{tpu_custom_call.1} parent=1 // pred_region
      %s45 = ssub.s32 8192, 8192
      %46 = vsyncadd [#allocation6], %s45
      %s47 = sshll.u32 [#allocation7], 4
      %s48 = int_to_ptr.vmem [resolvable:$true] %s47
      %53 = dma.hbm_to_vmem [thread:$0]  %s3, 8192, %s48, [#allocation6], 128, 128, 8
    $region17: #{tpu_custom_call.1} parent=1 // pred_fallthru
      _
    // Predicated region
    $region18: #{tpu_custom_call.1} parent=1 // pred_check
      _
    $region19: #{tpu_custom_call.1} parent=1 // pred_check_branch
      %55 = sbr.rel (0) target = $region21
    $region20: #{tpu_custom_call.1} parent=1 // pred_region
      _
    $region21: #{tpu_custom_call.1} parent=1 // pred_fallthru
      _
    // Predicated region
    $region22: #{tpu_custom_call.1} parent=1 // pred_check
      _
    $region23: #{tpu_custom_call.1} parent=1 // pred_check_branch
      %57 = sbr.rel (0) target = $region25
    $region24: #{tpu_custom_call.1} parent=1 // pred_region
      %s59 = ssub.s32 2048, 2048
      %60 = vsyncadd [#allocation9], %s59
      %s61 = sshll.u32 [#allocation8], 4
      %s62 = int_to_ptr.vmem [resolvable:$true] %s61
      %67 = dma.hbm_to_vmem [thread:$0]  %s5, 2048, %s62, [#allocation9], 64, 64, 4
    $region25: #{tpu_custom_call.1} parent=1 // pred_fallthru
      _
    // Predicated region
    $region26: #{tpu_custom_call.1} parent=1 // pred_check
      _
    $region27: #{tpu_custom_call.1} parent=1 // pred_check_branch
      %69 = sbr.rel (0) target = $region29
    $region28: #{tpu_custom_call.1} parent=1 // pred_region
      _
    $region29: #{tpu_custom_call.1} parent=1 // pred_fallthru
      _
    // Predicated region
    $region30: #{tpu_custom_call.1} parent=1 // pred_check
      _
    $region31: #{tpu_custom_call.1} parent=1 // pred_check_branch
      %71 = sbr.rel (0) target = $region33
    $region32: #{tpu_custom_call.1} parent=1 // pred_region
      %72 = dma.done [#allocation3], 1792
    $region33: #{tpu_custom_call.1} parent=1 // pred_fallthru
      _
    // Predicated region
    $region34: #{tpu_custom_call.1} parent=1 // pred_check
      _
    $region35: #{tpu_custom_call.1} parent=1 // pred_check_branch
      %74 = sbr.rel (0) target = $region37
    $region36: #{tpu_custom_call.1} parent=1 // pred_region
      %75 = dma.done [#allocation6], 25088
    $region37: #{tpu_custom_call.1} parent=1 // pred_fallthru
      _
    // Predicated region
    $region38: #{tpu_custom_call.1} parent=1 // pred_check
      _
    $region39: #{tpu_custom_call.1} parent=1 // pred_check_branch
      %77 = sbr.rel (0) target = $region41
    $region40: #{tpu_custom_call.1} parent=1 // pred_region
      %78 = dma.done [#allocation6], 8192
    $region41: #{tpu_custom_call.1} parent=1 // pred_fallthru
      _
    // Predicated region
    $region42: #{tpu_custom_call.1} parent=1 // pred_check
      _
    $region43: #{tpu_custom_call.1} parent=1 // pred_check_branch
      %80 = sbr.rel (0) target = $region45
    $region44: #{tpu_custom_call.1} parent=1 // pred_region
      %81 = dma.done [#allocation9], 2048
    $region45: #{tpu_custom_call.1} parent=1 // pred_fallthru
      _
    %v83 = vld [vmem:[#allocation2] sm:$0xff]
    %v84 = vld [vmem:[#allocation2 + $0x8] sm:$0xff]
    %v85 = vld [vmem:[#allocation2 + $0x10] sm:$0xff]
    %v86 = vld [vmem:[#allocation2 + $0x18] sm:$0xff]
    %v87 = vld [vmem:[#allocation2 + $0x20] sm:$0xff]
    %v88 = vld [vmem:[#allocation2 + $0x28] sm:$0xff]
    %v89 = vld [vmem:[#allocation2 + $0x30] sm:$0xff]
    %v90 = vld [vmem:[#allocation2 + $0x38] sm:$0xff]
    %v91 = vld [vmem:[#allocation2 + $0x40] sm:$0xff]
    %v92 = vld [vmem:[#allocation2 + $0x48] sm:$0xff]
    %v93 = vld [vmem:[#allocation2 + $0x50] sm:$0xff]
    %v94 = vld [vmem:[#allocation2 + $0x58] sm:$0xff]
    %v95 = vld [vmem:[#allocation2 + $0x60] sm:$0xff]
    %v96 = vld [vmem:[#allocation2 + $0x68] sm:$0xff]
    %v97 = vpack.c.bf16 %v90, %v83
    %v98 = vpack.c.bf16 %v91, %v84
    %v99 = vpack.c.bf16 %v92, %v85
    %v100 = vpack.c.bf16 %v93, %v86
    %v101 = vpack.c.bf16 %v94, %v87
    %v102 = vpack.c.bf16 %v95, %v88
    %v103 = vpack.c.bf16 %v96, %v89
    %v104 = vld [vmem:[#allocation5] sm:$0xff]
    %v105 = vld [vmem:[#allocation5 + $0x8] sm:$0xff]
    %v106 = vld [vmem:[#allocation5 + $0x10] sm:$0xff]
    %v107 = vld [vmem:[#allocation5 + $0x18] sm:$0xff]
    %v108 = vld [vmem:[#allocation5 + $0x20] sm:$0xff]
    %v109 = vld [vmem:[#allocation5 + $0x28] sm:$0xff]
    %v110 = vld [vmem:[#allocation5 + $0x30] sm:$0xff]
    %v111 = vld [vmem:[#allocation5 + $0x38] sm:$0xff]
    %v112 = vld [vmem:[#allocation5 + $0x40] sm:$0xff]
    %v113 = vld [vmem:[#allocation5 + $0x48] sm:$0xff]
    %v114 = vld [vmem:[#allocation5 + $0x50] sm:$0xff]
    %v115 = vld [vmem:[#allocation5 + $0x58] sm:$0xff]
    %v116 = vld [vmem:[#allocation5 + $0x60] sm:$0xff]
    %v117 = vld [vmem:[#allocation5 + $0x68] sm:$0xff]
    %v118 = vld [vmem:[#allocation5 + $0x70] sm:$0xff]
    %v119 = vld [vmem:[#allocation5 + $0x78] sm:$0xff]
    %v120 = vld [vmem:[#allocation5 + $0x80] sm:$0xff]
    %v121 = vld [vmem:[#allocation5 + $0x88] sm:$0xff]
    %v122 = vld [vmem:[#allocation5 + $0x90] sm:$0xff]
    %v123 = vld [vmem:[#allocation5 + $0x98] sm:$0xff]
    %v124 = vld [vmem:[#allocation5 + $0xa0] sm:$0xff]
    %v125 = vld [vmem:[#allocation5 + $0xa8] sm:$0xff]
    %v126 = vld [vmem:[#allocation5 + $0xb0] sm:$0xff]
    %v127 = vld [vmem:[#allocation5 + $0xb8] sm:$0xff]
    %v128 = vld [vmem:[#allocation5 + $0xc0] sm:$0xff]
    %v129 = vld [vmem:[#allocation5 + $0xc8] sm:$0xff]
    %v130 = vld [vmem:[#allocation5 + $0xd0] sm:$0xff]
    %v131 = vld [vmem:[#allocation5 + $0xd8] sm:$0xff]
    %v132 = vld [vmem:[#allocation5 + $0xe0] sm:$0xff]
    %v133 = vld [vmem:[#allocation5 + $0xe8] sm:$0xff]
    %v134 = vld [vmem:[#allocation5 + $0xf0] sm:$0xff]
    %v135 = vld [vmem:[#allocation5 + $0xf8] sm:$0xff]
    %v136 = vld [vmem:[#allocation5 + $0x100] sm:$0xff]
    %v137 = vld [vmem:[#allocation5 + $0x108] sm:$0xff]
    %v138 = vld [vmem:[#allocation5 + $0x110] sm:$0xff]
    %v139 = vld [vmem:[#allocation5 + $0x118] sm:$0xff]
    %v140 = vld [vmem:[#allocation5 + $0x120] sm:$0xff]
    %v141 = vld [vmem:[#allocation5 + $0x128] sm:$0xff]
    %v142 = vld [vmem:[#allocation5 + $0x130] sm:$0xff]
    %v143 = vld [vmem:[#allocation5 + $0x138] sm:$0xff]
    %v144 = vld [vmem:[#allocation5 + $0x140] sm:$0xff]
    %v145 = vld [vmem:[#allocation5 + $0x148] sm:$0xff]
    %v146 = vld [vmem:[#allocation5 + $0x150] sm:$0xff]
    %v147 = vld [vmem:[#allocation5 + $0x158] sm:$0xff]
    %v148 = vld [vmem:[#allocation5 + $0x160] sm:$0xff]
    %v149 = vld [vmem:[#allocation5 + $0x168] sm:$0xff]
    %v150 = vld [vmem:[#allocation5 + $0x170] sm:$0xff]
    %v151 = vld [vmem:[#allocation5 + $0x178] sm:$0xff]
    %v152 = vld [vmem:[#allocation5 + $0x180] sm:$0xff]
    %v153 = vld [vmem:[#allocation5 + $0x188] sm:$0xff]
    %v154 = vld [vmem:[#allocation5 + $0x190] sm:$0xff]
    %v155 = vld [vmem:[#allocation5 + $0x198] sm:$0xff]
    %v156 = vld [vmem:[#allocation5 + $0x1a0] sm:$0xff]
    %v157 = vld [vmem:[#allocation5 + $0x1a8] sm:$0xff]
    %v158 = vld [vmem:[#allocation5 + $0x1b0] sm:$0xff]
    %v159 = vld [vmem:[#allocation5 + $0x1b8] sm:$0xff]
    %v160 = vld [vmem:[#allocation5 + $0x1c0] sm:$0xff]
    %v161 = vld [vmem:[#allocation5 + $0x1c8] sm:$0xff]
    %v162 = vld [vmem:[#allocation5 + $0x1d0] sm:$0xff]
    %v163 = vld [vmem:[#allocation5 + $0x1d8] sm:$0xff]
    %v164 = vld [vmem:[#allocation5 + $0x1e0] sm:$0xff]
    %v165 = vld [vmem:[#allocation5 + $0x1e8] sm:$0xff]
    %v166 = vld [vmem:[#allocation5 + $0x1f0] sm:$0xff]
    %v167 = vld [vmem:[#allocation5 + $0x1f8] sm:$0xff]
    %v168 = vld [vmem:[#allocation5 + $0x200] sm:$0xff]
    %v169 = vld [vmem:[#allocation5 + $0x208] sm:$0xff]
    %v170 = vld [vmem:[#allocation5 + $0x210] sm:$0xff]
    %v171 = vld [vmem:[#allocation5 + $0x218] sm:$0xff]
    %v172 = vld [vmem:[#allocation5 + $0x220] sm:$0xff]
    %v173 = vld [vmem:[#allocation5 + $0x228] sm:$0xff]
    %v174 = vld [vmem:[#allocation5 + $0x230] sm:$0xff]
    %v175 = vld [vmem:[#allocation5 + $0x238] sm:$0xff]
    %v176 = vld [vmem:[#allocation5 + $0x240] sm:$0xff]
    %v177 = vld [vmem:[#allocation5 + $0x248] sm:$0xff]
    %v178 = vld [vmem:[#allocation5 + $0x250] sm:$0xff]
    %v179 = vld [vmem:[#allocation5 + $0x258] sm:$0xff]
    %v180 = vld [vmem:[#allocation5 + $0x260] sm:$0xff]
    %v181 = vld [vmem:[#allocation5 + $0x268] sm:$0xff]
    %v182 = vld [vmem:[#allocation5 + $0x270] sm:$0xff]
    %v183 = vld [vmem:[#allocation5 + $0x278] sm:$0xff]
    %v184 = vld [vmem:[#allocation5 + $0x280] sm:$0xff]
    %v185 = vld [vmem:[#allocation5 + $0x288] sm:$0xff]
    %v186 = vld [vmem:[#allocation5 + $0x290] sm:$0xff]
    %v187 = vld [vmem:[#allocation5 + $0x298] sm:$0xff]
    %v188 = vld [vmem:[#allocation5 + $0x2a0] sm:$0xff]
    %v189 = vld [vmem:[#allocation5 + $0x2a8] sm:$0xff]
    %v190 = vld [vmem:[#allocation5 + $0x2b0] sm:$0xff]
    %v191 = vld [vmem:[#allocation5 + $0x2b8] sm:$0xff]
    %v192 = vld [vmem:[#allocation5 + $0x2c0] sm:$0xff]
    %v193 = vld [vmem:[#allocation5 + $0x2c8] sm:$0xff]
    %v194 = vld [vmem:[#allocation5 + $0x2d0] sm:$0xff]
    %v195 = vld [vmem:[#allocation5 + $0x2d8] sm:$0xff]
    %v196 = vld [vmem:[#allocation5 + $0x2e0] sm:$0xff]
    %v197 = vld [vmem:[#allocation5 + $0x2e8] sm:$0xff]
    %v198 = vld [vmem:[#allocation5 + $0x2f0] sm:$0xff]
    %v199 = vld [vmem:[#allocation5 + $0x2f8] sm:$0xff]
    %v200 = vld [vmem:[#allocation5 + $0x300] sm:$0xff]
    %v201 = vld [vmem:[#allocation5 + $0x308] sm:$0xff]
    %v202 = vld [vmem:[#allocation5 + $0x310] sm:$0xff]
    %v203 = vld [vmem:[#allocation5 + $0x318] sm:$0xff]
    %v204 = vld [vmem:[#allocation5 + $0x320] sm:$0xff]
    %v205 = vld [vmem:[#allocation5 + $0x328] sm:$0xff]
    %v206 = vld [vmem:[#allocation5 + $0x330] sm:$0xff]
    %v207 = vld [vmem:[#allocation5 + $0x338] sm:$0xff]
    %v208 = vld [vmem:[#allocation5 + $0x340] sm:$0xff]
    %v209 = vld [vmem:[#allocation5 + $0x348] sm:$0xff]
    %v210 = vld [vmem:[#allocation5 + $0x350] sm:$0xff]
    %v211 = vld [vmem:[#allocation5 + $0x358] sm:$0xff]
    %v212 = vld [vmem:[#allocation5 + $0x360] sm:$0xff]
    %v213 = vld [vmem:[#allocation5 + $0x368] sm:$0xff]
    %v214 = vld [vmem:[#allocation5 + $0x370] sm:$0xff]
    %v215 = vld [vmem:[#allocation5 + $0x378] sm:$0xff]
    %v216 = vld [vmem:[#allocation5 + $0x380] sm:$0xff]
    %v217 = vld [vmem:[#allocation5 + $0x388] sm:$0xff]
    %v218 = vld [vmem:[#allocation5 + $0x390] sm:$0xff]
    %v219 = vld [vmem:[#allocation5 + $0x398] sm:$0xff]
    %v220 = vld [vmem:[#allocation5 + $0x3a0] sm:$0xff]
    %v221 = vld [vmem:[#allocation5 + $0x3a8] sm:$0xff]
    %v222 = vld [vmem:[#allocation5 + $0x3b0] sm:$0xff]
    %v223 = vld [vmem:[#allocation5 + $0x3b8] sm:$0xff]
    %v224 = vld [vmem:[#allocation5 + $0x3c0] sm:$0xff]
    %v225 = vld [vmem:[#allocation5 + $0x3c8] sm:$0xff]
    %v226 = vld [vmem:[#allocation5 + $0x3d0] sm:$0xff]
    %v227 = vld [vmem:[#allocation5 + $0x3d8] sm:$0xff]
    %v228 = vld [vmem:[#allocation5 + $0x3e0] sm:$0xff]
    %v229 = vld [vmem:[#allocation5 + $0x3e8] sm:$0xff]
    %v230 = vld [vmem:[#allocation5 + $0x3f0] sm:$0xff]
    %v231 = vld [vmem:[#allocation5 + $0x3f8] sm:$0xff]
    %v232 = vld [vmem:[#allocation5 + $0x400] sm:$0xff]
    %v233 = vld [vmem:[#allocation5 + $0x408] sm:$0xff]
    %v234 = vld [vmem:[#allocation5 + $0x410] sm:$0xff]
    %v235 = vld [vmem:[#allocation5 + $0x418] sm:$0xff]
    %v236 = vld [vmem:[#allocation5 + $0x420] sm:$0xff]
    %v237 = vld [vmem:[#allocation5 + $0x428] sm:$0xff]
    %v238 = vld [vmem:[#allocation5 + $0x430] sm:$0xff]
    %v239 = vld [vmem:[#allocation5 + $0x438] sm:$0xff]
    %v240 = vld [vmem:[#allocation5 + $0x440] sm:$0xff]
    %v241 = vld [vmem:[#allocation5 + $0x448] sm:$0xff]
    %v242 = vld [vmem:[#allocation5 + $0x450] sm:$0xff]
    %v243 = vld [vmem:[#allocation5 + $0x458] sm:$0xff]
    %v244 = vld [vmem:[#allocation5 + $0x460] sm:$0xff]
    %v245 = vld [vmem:[#allocation5 + $0x468] sm:$0xff]
    %v246 = vld [vmem:[#allocation5 + $0x470] sm:$0xff]
    %v247 = vld [vmem:[#allocation5 + $0x478] sm:$0xff]
    %v248 = vld [vmem:[#allocation5 + $0x480] sm:$0xff]
    %v249 = vld [vmem:[#allocation5 + $0x488] sm:$0xff]
    %v250 = vld [vmem:[#allocation5 + $0x490] sm:$0xff]
    %v251 = vld [vmem:[#allocation5 + $0x498] sm:$0xff]
    %v252 = vld [vmem:[#allocation5 + $0x4a0] sm:$0xff]
    %v253 = vld [vmem:[#allocation5 + $0x4a8] sm:$0xff]
    %v254 = vld [vmem:[#allocation5 + $0x4b0] sm:$0xff]
    %v255 = vld [vmem:[#allocation5 + $0x4b8] sm:$0xff]
    %v256 = vld [vmem:[#allocation5 + $0x4c0] sm:$0xff]
    %v257 = vld [vmem:[#allocation5 + $0x4c8] sm:$0xff]
    %v258 = vld [vmem:[#allocation5 + $0x4d0] sm:$0xff]
    %v259 = vld [vmem:[#allocation5 + $0x4d8] sm:$0xff]
    %v260 = vld [vmem:[#allocation5 + $0x4e0] sm:$0xff]
    %v261 = vld [vmem:[#allocation5 + $0x4e8] sm:$0xff]
    %v262 = vld [vmem:[#allocation5 + $0x4f0] sm:$0xff]
    %v263 = vld [vmem:[#allocation5 + $0x4f8] sm:$0xff]
    %v264 = vld [vmem:[#allocation5 + $0x500] sm:$0xff]
    %v265 = vld [vmem:[#allocation5 + $0x508] sm:$0xff]
    %v266 = vld [vmem:[#allocation5 + $0x510] sm:$0xff]
    %v267 = vld [vmem:[#allocation5 + $0x518] sm:$0xff]
    %v268 = vld [vmem:[#allocation5 + $0x520] sm:$0xff]
    %v269 = vld [vmem:[#allocation5 + $0x528] sm:$0xff]
    %v270 = vld [vmem:[#allocation5 + $0x530] sm:$0xff]
    %v271 = vld [vmem:[#allocation5 + $0x538] sm:$0xff]
    %v272 = vld [vmem:[#allocation5 + $0x540] sm:$0xff]
    %v273 = vld [vmem:[#allocation5 + $0x548] sm:$0xff]
    %v274 = vld [vmem:[#allocation5 + $0x550] sm:$0xff]
    %v275 = vld [vmem:[#allocation5 + $0x558] sm:$0xff]
    %v276 = vld [vmem:[#allocation5 + $0x560] sm:$0xff]
    %v277 = vld [vmem:[#allocation5 + $0x568] sm:$0xff]
    %v278 = vld [vmem:[#allocation5 + $0x570] sm:$0xff]
    %v279 = vld [vmem:[#allocation5 + $0x578] sm:$0xff]
    %v280 = vld [vmem:[#allocation5 + $0x580] sm:$0xff]
    %v281 = vld [vmem:[#allocation5 + $0x588] sm:$0xff]
    %v282 = vld [vmem:[#allocation5 + $0x590] sm:$0xff]
    %v283 = vld [vmem:[#allocation5 + $0x598] sm:$0xff]
    %v284 = vld [vmem:[#allocation5 + $0x5a0] sm:$0xff]
    %v285 = vld [vmem:[#allocation5 + $0x5a8] sm:$0xff]
    %v286 = vld [vmem:[#allocation5 + $0x5b0] sm:$0xff]
    %v287 = vld [vmem:[#allocation5 + $0x5b8] sm:$0xff]
    %v288 = vld [vmem:[#allocation5 + $0x5c0] sm:$0xff]
    %v289 = vld [vmem:[#allocation5 + $0x5c8] sm:$0xff]
    %v290 = vld [vmem:[#allocation5 + $0x5d0] sm:$0xff]
    %v291 = vld [vmem:[#allocation5 + $0x5d8] sm:$0xff]
    %v292 = vld [vmem:[#allocation5 + $0x5e0] sm:$0xff]
    %v293 = vld [vmem:[#allocation5 + $0x5e8] sm:$0xff]
    %v294 = vld [vmem:[#allocation5 + $0x5f0] sm:$0xff]
    %v295 = vld [vmem:[#allocation5 + $0x5f8] sm:$0xff]
    %v296 = vld [vmem:[#allocation5 + $0x600] sm:$0xff]
    %v297 = vld [vmem:[#allocation5 + $0x608] sm:$0xff]
    %v298 = vld [vmem:[#allocation5 + $0x610] sm:$0xff]
    %v299 = vld [vmem:[#allocation5 + $0x618] sm:$0xff]
    %v300 = vld [vmem:[%s2] sm:$0xf]
    %v302 = vlaneseq
    %v303 = vshrl.u32 %v302, 7
    %v304 = vsub.s32 0, %v303
    %v305 = vrot.slane %v300, %v304
    %v306 = vlaneseq
    %v307 = vshrl.u32 %v306, 7
    %v308 = vsub.s32 1, %v307
    %v309 = vrot.slane %v300, %v308
    %v310 = vlaneseq
    %v311 = vshrl.u32 %v310, 7
    %v312 = vsub.s32 2, %v311
    %v313 = vrot.slane %v300, %v312
    %v314 = vlaneseq
    %v315 = vshrl.u32 %v314, 7
    %v316 = vsub.s32 3, %v315
    %v317 = vrot.slane %v300, %v316
    %v518 = vunpack.c.l.b16 %v104
    %v519 = vunpack.c.h.b16 %v104
    %v520 = vunpack.c.l.b16 %v105
    %v521 = vunpack.c.h.b16 %v105
    %v522 = vunpack.c.l.b16 %v106
    %v523 = vunpack.c.h.b16 %v106
    %v524 = vunpack.c.l.b16 %v107
    %v525 = vunpack.c.h.b16 %v107
    %v526 = vunpack.c.l.b16 %v108
    %v527 = vunpack.c.h.b16 %v108
    %v528 = vunpack.c.l.b16 %v109
    %v529 = vunpack.c.h.b16 %v109
    %v530 = vunpack.c.l.b16 %v110
    %v531 = vunpack.c.h.b16 %v110
    %v532 = vunpack.c.l.b16 %v111
    %v533 = vunpack.c.h.b16 %v111
    %v534 = vunpack.c.l.b16 %v112
    %v535 = vunpack.c.h.b16 %v112
    %v536 = vunpack.c.l.b16 %v113
    %v537 = vunpack.c.h.b16 %v113
    %v538 = vunpack.c.l.b16 %v114
    %v539 = vunpack.c.h.b16 %v114
    %v540 = vunpack.c.l.b16 %v115
    %v541 = vunpack.c.h.b16 %v115
    %v542 = vunpack.c.l.b16 %v116
    %v543 = vunpack.c.h.b16 %v116
    %v544 = vunpack.c.l.b16 %v117
    %v545 = vunpack.c.h.b16 %v117
    %v546 = vunpack.c.l.b16 %v118
    %v547 = vunpack.c.h.b16 %v118
    %v548 = vunpack.c.l.b16 %v119
    %v549 = vunpack.c.h.b16 %v119
    %v550 = vunpack.c.l.b16 %v120
    %v551 = vunpack.c.h.b16 %v120
    %v552 = vunpack.c.l.b16 %v121
    %v553 = vunpack.c.h.b16 %v121
    %v554 = vunpack.c.l.b16 %v122
    %v555 = vunpack.c.h.b16 %v122
    %v556 = vunpack.c.l.b16 %v123
    %v557 = vunpack.c.h.b16 %v123
    %v558 = vunpack.c.l.b16 %v124
    %v559 = vunpack.c.h.b16 %v124
    %v560 = vunpack.c.l.b16 %v125
    %v561 = vunpack.c.h.b16 %v125
    %v562 = vunpack.c.l.b16 %v126
    %v563 = vunpack.c.h.b16 %v126
    %v564 = vunpack.c.l.b16 %v127
    %v565 = vunpack.c.h.b16 %v127
    %v566 = vunpack.c.l.b16 %v128
    %v567 = vunpack.c.h.b16 %v128
    %v568 = vunpack.c.l.b16 %v129
    %v569 = vunpack.c.h.b16 %v129
    %v570 = vunpack.c.l.b16 %v130
    %v571 = vunpack.c.h.b16 %v130
    %v572 = vunpack.c.l.b16 %v131
    %v573 = vunpack.c.h.b16 %v131
    %v574 = vunpack.c.l.b16 %v132
    %v575 = vunpack.c.h.b16 %v132
    %v576 = vunpack.c.l.b16 %v133
    %v577 = vunpack.c.h.b16 %v133
    %v578 = vunpack.c.l.b16 %v134
    %v579 = vunpack.c.h.b16 %v134
    %v580 = vunpack.c.l.b16 %v135
    %v581 = vunpack.c.h.b16 %v135
    %v582 = vunpack.c.l.b16 %v136
    %v583 = vunpack.c.h.b16 %v136
    %v584 = vunpack.c.l.b16 %v137
    %v585 = vunpack.c.h.b16 %v137
    %v586 = vunpack.c.l.b16 %v138
    %v587 = vunpack.c.h.b16 %v138
    %v588 = vunpack.c.l.b16 %v139
    %v589 = vunpack.c.h.b16 %v139
    %v590 = vunpack.c.l.b16 %v140
    %v591 = vunpack.c.h.b16 %v140
    %v592 = vunpack.c.l.b16 %v141
    %v593 = vunpack.c.h.b16 %v141
    %v594 = vunpack.c.l.b16 %v142
    %v595 = vunpack.c.h.b16 %v142
    %v596 = vunpack.c.l.b16 %v143
    %v597 = vunpack.c.h.b16 %v143
    %v598 = vunpack.c.l.b16 %v144
    %v599 = vunpack.c.h.b16 %v144
    %v600 = vunpack.c.l.b16 %v145
    %v601 = vunpack.c.h.b16 %v145
    %v602 = vunpack.c.l.b16 %v146
    %v603 = vunpack.c.h.b16 %v146
    %v604 = vunpack.c.l.b16 %v147
    %v605 = vunpack.c.h.b16 %v147
    %v606 = vunpack.c.l.b16 %v148
    %v607 = vunpack.c.h.b16 %v148
    %v608 = vunpack.c.l.b16 %v149
    %v609 = vunpack.c.h.b16 %v149
    %v610 = vunpack.c.l.b16 %v150
    %v611 = vunpack.c.h.b16 %v150
    %v612 = vunpack.c.l.b16 %v151
    %v613 = vunpack.c.h.b16 %v151
    %v614 = vunpack.c.l.b16 %v152
    %v615 = vunpack.c.h.b16 %v152
    %v616 = vunpack.c.l.b16 %v153
    %v617 = vunpack.c.h.b16 %v153
    %v618 = vunpack.c.l.b16 %v154
    %v619 = vunpack.c.h.b16 %v154
    %v620 = vunpack.c.l.b16 %v155
    %v621 = vunpack.c.h.b16 %v155
    %v622 = vunpack.c.l.b16 %v156
    %v623 = vunpack.c.h.b16 %v156
    %v624 = vunpack.c.l.b16 %v157
    %v625 = vunpack.c.h.b16 %v157
    %v626 = vunpack.c.l.b16 %v158
    %v627 = vunpack.c.h.b16 %v158
    %v628 = vunpack.c.l.b16 %v159
    %v629 = vunpack.c.h.b16 %v159
    %v630 = vunpack.c.l.b16 %v160
    %v631 = vunpack.c.h.b16 %v160
    %v632 = vunpack.c.l.b16 %v161
    %v633 = vunpack.c.h.b16 %v161
    %v634 = vunpack.c.l.b16 %v162
    %v635 = vunpack.c.h.b16 %v162
    %v636 = vunpack.c.l.b16 %v163
    %v637 = vunpack.c.h.b16 %v163
    %v638 = vunpack.c.l.b16 %v164
    %v639 = vunpack.c.h.b16 %v164
    %v640 = vunpack.c.l.b16 %v165
    %v641 = vunpack.c.h.b16 %v165
    %v642 = vunpack.c.l.b16 %v166
    %v643 = vunpack.c.h.b16 %v166
    %v644 = vunpack.c.l.b16 %v167
    %v645 = vunpack.c.h.b16 %v167
    %v646 = vunpack.c.l.b16 %v168
    %v647 = vunpack.c.h.b16 %v168
    %v648 = vunpack.c.l.b16 %v169
    %v649 = vunpack.c.h.b16 %v169
    %v650 = vunpack.c.l.b16 %v170
    %v651 = vunpack.c.h.b16 %v170
    %v652 = vunpack.c.l.b16 %v171
    %v653 = vunpack.c.h.b16 %v171
    %v654 = vunpack.c.l.b16 %v172
    %v655 = vunpack.c.h.b16 %v172
    %v656 = vunpack.c.l.b16 %v173
    %v657 = vunpack.c.h.b16 %v173
    %v658 = vunpack.c.l.b16 %v174
    %v659 = vunpack.c.h.b16 %v174
    %v660 = vunpack.c.l.b16 %v175
    %v661 = vunpack.c.h.b16 %v175
    %v662 = vunpack.c.l.b16 %v176
    %v663 = vunpack.c.h.b16 %v176
    %v664 = vunpack.c.l.b16 %v177
    %v665 = vunpack.c.h.b16 %v177
    %v666 = vunpack.c.l.b16 %v178
    %v667 = vunpack.c.h.b16 %v178
    %v668 = vunpack.c.l.b16 %v179
    %v669 = vunpack.c.h.b16 %v179
    %v670 = vunpack.c.l.b16 %v180
    %v671 = vunpack.c.h.b16 %v180
    %v672 = vunpack.c.l.b16 %v181
    %v673 = vunpack.c.h.b16 %v181
    %v674 = vunpack.c.l.b16 %v182
    %v675 = vunpack.c.h.b16 %v182
    %v676 = vunpack.c.l.b16 %v183
    %v677 = vunpack.c.h.b16 %v183
    %v678 = vunpack.c.l.b16 %v184
    %v679 = vunpack.c.h.b16 %v184
    %v680 = vunpack.c.l.b16 %v185
    %v681 = vunpack.c.h.b16 %v185
    %v682 = vunpack.c.l.b16 %v186
    %v683 = vunpack.c.h.b16 %v186
    %v684 = vunpack.c.l.b16 %v187
    %v685 = vunpack.c.h.b16 %v187
    %v686 = vunpack.c.l.b16 %v188
    %v687 = vunpack.c.h.b16 %v188
    %v688 = vunpack.c.l.b16 %v189
    %v689 = vunpack.c.h.b16 %v189
    %v690 = vunpack.c.l.b16 %v190
    %v691 = vunpack.c.h.b16 %v190
    %v692 = vunpack.c.l.b16 %v191
    %v693 = vunpack.c.h.b16 %v191
    %v694 = vunpack.c.l.b16 %v192
    %v695 = vunpack.c.h.b16 %v192
    %v696 = vunpack.c.l.b16 %v193
    %v697 = vunpack.c.h.b16 %v193
    %v698 = vunpack.c.l.b16 %v194
    %v699 = vunpack.c.h.b16 %v194
    %v700 = vunpack.c.l.b16 %v195
    %v701 = vunpack.c.h.b16 %v195
    %v702 = vunpack.c.l.b16 %v196
    %v703 = vunpack.c.h.b16 %v196
    %v704 = vunpack.c.l.b16 %v197
    %v705 = vunpack.c.h.b16 %v197
    %v706 = vunpack.c.l.b16 %v198
    %v707 = vunpack.c.h.b16 %v198
    %v708 = vunpack.c.l.b16 %v199
    %v709 = vunpack.c.h.b16 %v199
    %v710 = vunpack.c.l.b16 %v200
    %v711 = vunpack.c.h.b16 %v200
    %v712 = vunpack.c.l.b16 %v201
    %v713 = vunpack.c.h.b16 %v201
    %v714 = vunpack.c.l.b16 %v202
    %v715 = vunpack.c.h.b16 %v202
    %v716 = vunpack.c.l.b16 %v203
    %v717 = vunpack.c.h.b16 %v203
    %v718 = vunpack.c.l.b16 %v204
    %v719 = vunpack.c.h.b16 %v204
    %v720 = vunpack.c.l.b16 %v205
    %v721 = vunpack.c.h.b16 %v205
    %v722 = vunpack.c.l.b16 %v206
    %v723 = vunpack.c.h.b16 %v206
    %v724 = vunpack.c.l.b16 %v207
    %v725 = vunpack.c.h.b16 %v207
    %v726 = vunpack.c.l.b16 %v208
    %v727 = vunpack.c.h.b16 %v208
    %v728 = vunpack.c.l.b16 %v209
    %v729 = vunpack.c.h.b16 %v209
    %v730 = vunpack.c.l.b16 %v210
    %v731 = vunpack.c.h.b16 %v210
    %v732 = vunpack.c.l.b16 %v211
    %v733 = vunpack.c.h.b16 %v211
    %v734 = vunpack.c.l.b16 %v212
    %v735 = vunpack.c.h.b16 %v212
    %v736 = vunpack.c.l.b16 %v213
    %v737 = vunpack.c.h.b16 %v213
    %v738 = vunpack.c.l.b16 %v214
    %v739 = vunpack.c.h.b16 %v214
    %v740 = vunpack.c.l.b16 %v215
    %v741 = vunpack.c.h.b16 %v215
    %v742 = vunpack.c.l.b16 %v216
    %v743 = vunpack.c.h.b16 %v216
    %v744 = vunpack.c.l.b16 %v217
    %v745 = vunpack.c.h.b16 %v217
    %v746 = vunpack.c.l.b16 %v218
    %v747 = vunpack.c.h.b16 %v218
    %v748 = vunpack.c.l.b16 %v219
    %v749 = vunpack.c.h.b16 %v219
    %v750 = vunpack.c.l.b16 %v220
    %v751 = vunpack.c.h.b16 %v220
    %v752 = vunpack.c.l.b16 %v221
    %v753 = vunpack.c.h.b16 %v221
    %v754 = vunpack.c.l.b16 %v222
    %v755 = vunpack.c.h.b16 %v222
    %v756 = vunpack.c.l.b16 %v223
    %v757 = vunpack.c.h.b16 %v223
    %v758 = vunpack.c.l.b16 %v224
    %v759 = vunpack.c.h.b16 %v224
    %v760 = vunpack.c.l.b16 %v225
    %v761 = vunpack.c.h.b16 %v225
    %v762 = vunpack.c.l.b16 %v226
    %v763 = vunpack.c.h.b16 %v226
    %v764 = vunpack.c.l.b16 %v227
    %v765 = vunpack.c.h.b16 %v227
    %v766 = vunpack.c.l.b16 %v228
    %v767 = vunpack.c.h.b16 %v228
    %v768 = vunpack.c.l.b16 %v229
    %v769 = vunpack.c.h.b16 %v229
    %v770 = vunpack.c.l.b16 %v230
    %v771 = vunpack.c.h.b16 %v230
    %v772 = vunpack.c.l.b16 %v231
    %v773 = vunpack.c.h.b16 %v231
    %v774 = vunpack.c.l.b16 %v232
    %v775 = vunpack.c.h.b16 %v232
    %v776 = vunpack.c.l.b16 %v233
    %v777 = vunpack.c.h.b16 %v233
    %v778 = vunpack.c.l.b16 %v234
    %v779 = vunpack.c.h.b16 %v234
    %v780 = vunpack.c.l.b16 %v235
    %v781 = vunpack.c.h.b16 %v235
    %v782 = vunpack.c.l.b16 %v236
    %v783 = vunpack.c.h.b16 %v236
    %v784 = vunpack.c.l.b16 %v237
    %v785 = vunpack.c.h.b16 %v237
    %v786 = vunpack.c.l.b16 %v238
    %v787 = vunpack.c.h.b16 %v238
    %v788 = vunpack.c.l.b16 %v239
    %v789 = vunpack.c.h.b16 %v239
    %v790 = vunpack.c.l.b16 %v240
    %v791 = vunpack.c.h.b16 %v240
    %v792 = vunpack.c.l.b16 %v241
    %v793 = vunpack.c.h.b16 %v241
    %v794 = vunpack.c.l.b16 %v242
    %v795 = vunpack.c.h.b16 %v242
    %v796 = vunpack.c.l.b16 %v243
    %v797 = vunpack.c.h.b16 %v243
    %v798 = vunpack.c.l.b16 %v244
    %v799 = vunpack.c.h.b16 %v244
    %v800 = vunpack.c.l.b16 %v245
    %v801 = vunpack.c.h.b16 %v245
    %v802 = vunpack.c.l.b16 %v246
    %v803 = vunpack.c.h.b16 %v246
    %v804 = vunpack.c.l.b16 %v247
    %v805 = vunpack.c.h.b16 %v247
    %v806 = vunpack.c.l.b16 %v248
    %v807 = vunpack.c.h.b16 %v248
    %v808 = vunpack.c.l.b16 %v249
    %v809 = vunpack.c.h.b16 %v249
    %v810 = vunpack.c.l.b16 %v250
    %v811 = vunpack.c.h.b16 %v250
    %v812 = vunpack.c.l.b16 %v251
    %v813 = vunpack.c.h.b16 %v251
    %v814 = vunpack.c.l.b16 %v252
    %v815 = vunpack.c.h.b16 %v252
    %v816 = vunpack.c.l.b16 %v253
    %v817 = vunpack.c.h.b16 %v253
    %v818 = vunpack.c.l.b16 %v254
    %v819 = vunpack.c.h.b16 %v254
    %v820 = vunpack.c.l.b16 %v255
    %v821 = vunpack.c.h.b16 %v255
    %v822 = vunpack.c.l.b16 %v256
    %v823 = vunpack.c.h.b16 %v256
    %v824 = vunpack.c.l.b16 %v257
    %v825 = vunpack.c.h.b16 %v257
    %v826 = vunpack.c.l.b16 %v258
    %v827 = vunpack.c.h.b16 %v258
    %v828 = vunpack.c.l.b16 %v259
    %v829 = vunpack.c.h.b16 %v259
    %v830 = vunpack.c.l.b16 %v260
    %v831 = vunpack.c.h.b16 %v260
    %v832 = vunpack.c.l.b16 %v261
    %v833 = vunpack.c.h.b16 %v261
    %v834 = vunpack.c.l.b16 %v262
    %v835 = vunpack.c.h.b16 %v262
    %v836 = vunpack.c.l.b16 %v263
    %v837 = vunpack.c.h.b16 %v263
    %v838 = vunpack.c.l.b16 %v264
    %v839 = vunpack.c.h.b16 %v264
    %v840 = vunpack.c.l.b16 %v265
    %v841 = vunpack.c.h.b16 %v265
    %v842 = vunpack.c.l.b16 %v266
    %v843 = vunpack.c.h.b16 %v266
    %v844 = vunpack.c.l.b16 %v267
    %v845 = vunpack.c.h.b16 %v267
    %v846 = vunpack.c.l.b16 %v268
    %v847 = vunpack.c.h.b16 %v268
    %v848 = vunpack.c.l.b16 %v269
    %v849 = vunpack.c.h.b16 %v269
    %v850 = vunpack.c.l.b16 %v270
    %v851 = vunpack.c.h.b16 %v270
    %v852 = vunpack.c.l.b16 %v271
    %v853 = vunpack.c.h.b16 %v271
    %v854 = vunpack.c.l.b16 %v272
    %v855 = vunpack.c.h.b16 %v272
    %v856 = vunpack.c.l.b16 %v273
    %v857 = vunpack.c.h.b16 %v273
    %v858 = vunpack.c.l.b16 %v274
    %v859 = vunpack.c.h.b16 %v274
    %v860 = vunpack.c.l.b16 %v275
    %v861 = vunpack.c.h.b16 %v275
    %v862 = vunpack.c.l.b16 %v276
    %v863 = vunpack.c.h.b16 %v276
    %v864 = vunpack.c.l.b16 %v277
    %v865 = vunpack.c.h.b16 %v277
    %v866 = vunpack.c.l.b16 %v278
    %v867 = vunpack.c.h.b16 %v278
    %v868 = vunpack.c.l.b16 %v279
    %v869 = vunpack.c.h.b16 %v279
    %v870 = vunpack.c.l.b16 %v280
    %v871 = vunpack.c.h.b16 %v280
    %v872 = vunpack.c.l.b16 %v281
    %v873 = vunpack.c.h.b16 %v281
    %v874 = vunpack.c.l.b16 %v282
    %v875 = vunpack.c.h.b16 %v282
    %v876 = vunpack.c.l.b16 %v283
    %v877 = vunpack.c.h.b16 %v283
    %v878 = vunpack.c.l.b16 %v284
    %v879 = vunpack.c.h.b16 %v284
    %v880 = vunpack.c.l.b16 %v285
    %v881 = vunpack.c.h.b16 %v285
    %v882 = vunpack.c.l.b16 %v286
    %v883 = vunpack.c.h.b16 %v286
    %v884 = vunpack.c.l.b16 %v287
    %v885 = vunpack.c.h.b16 %v287
    %v886 = vunpack.c.l.b16 %v288
    %v887 = vunpack.c.h.b16 %v288
    %v888 = vunpack.c.l.b16 %v289
    %v889 = vunpack.c.h.b16 %v289
    %v890 = vunpack.c.l.b16 %v290
    %v891 = vunpack.c.h.b16 %v290
    %v892 = vunpack.c.l.b16 %v291
    %v893 = vunpack.c.h.b16 %v291
    %v894 = vunpack.c.l.b16 %v292
    %v895 = vunpack.c.h.b16 %v292
    %v896 = vunpack.c.l.b16 %v293
    %v897 = vunpack.c.h.b16 %v293
    %v898 = vunpack.c.l.b16 %v294
    %v899 = vunpack.c.h.b16 %v294
    %v900 = vunpack.c.l.b16 %v295
    %v901 = vunpack.c.h.b16 %v295
    %v902 = vunpack.c.l.b16 %v296
    %v903 = vunpack.c.h.b16 %v296
    %v904 = vunpack.c.l.b16 %v297
    %v905 = vunpack.c.h.b16 %v297
    %v906 = vunpack.c.l.b16 %v298
    %v907 = vunpack.c.h.b16 %v298
    %v908 = vunpack.c.l.b16 %v299
    %v909 = vunpack.c.h.b16 %v299
    %v910 = vpack.c.b16 %v522, %v518
    %v911 = vpack.c.b16 %v523, %v519
    %v912 = vpack.c.b16 %v524, %v520
    %v913 = vpack.c.b16 %v525, %v521
    %v914 = vpack.c.b16 %v530, %v526
    %v915 = vpack.c.b16 %v531, %v527
    %v916 = vpack.c.b16 %v532, %v528
    %v917 = vpack.c.b16 %v533, %v529
    %v918 = vpack.c.b16 %v538, %v534
    %v919 = vpack.c.b16 %v539, %v535
    %v920 = vpack.c.b16 %v540, %v536
    %v921 = vpack.c.b16 %v541, %v537
    %v922 = vpack.c.b16 %v546, %v542
    %v923 = vpack.c.b16 %v547, %v543
    %v924 = vpack.c.b16 %v548, %v544
    %v925 = vpack.c.b16 %v549, %v545
    %v926 = vpack.c.b16 %v554, %v550
    %v927 = vpack.c.b16 %v555, %v551
    %v928 = vpack.c.b16 %v556, %v552
    %v929 = vpack.c.b16 %v557, %v553
    %v930 = vpack.c.b16 %v562, %v558
    %v931 = vpack.c.b16 %v563, %v559
    %v932 = vpack.c.b16 %v564, %v560
    %v933 = vpack.c.b16 %v565, %v561
    %v934 = vpack.c.b16 %v570, %v566
    %v935 = vpack.c.b16 %v571, %v567
    %v936 = vpack.c.b16 %v572, %v568
    %v937 = vpack.c.b16 %v573, %v569
    %v938 = vpack.c.b16 %v578, %v574
    %v939 = vpack.c.b16 %v579, %v575
    %v940 = vpack.c.b16 %v580, %v576
    %v941 = vpack.c.b16 %v581, %v577
    %v942 = vpack.c.b16 %v586, %v582
    %v943 = vpack.c.b16 %v587, %v583
    %v944 = vpack.c.b16 %v588, %v584
    %v945 = vpack.c.b16 %v589, %v585
    %v946 = vpack.c.b16 %v594, %v590
    %v947 = vpack.c.b16 %v595, %v591
    %v948 = vpack.c.b16 %v596, %v592
    %v949 = vpack.c.b16 %v597, %v593
    %v950 = vpack.c.b16 %v602, %v598
    %v951 = vpack.c.b16 %v603, %v599
    %v952 = vpack.c.b16 %v604, %v600
    %v953 = vpack.c.b16 %v605, %v601
    %v954 = vpack.c.b16 %v610, %v606
    %v955 = vpack.c.b16 %v611, %v607
    %v956 = vpack.c.b16 %v612, %v608
    %v957 = vpack.c.b16 %v613, %v609
    %v958 = vpack.c.b16 %v618, %v614
    %v959 = vpack.c.b16 %v619, %v615
    %v960 = vpack.c.b16 %v620, %v616
    %v961 = vpack.c.b16 %v621, %v617
    %v962 = vpack.c.b16 %v626, %v622
    %v963 = vpack.c.b16 %v627, %v623
    %v964 = vpack.c.b16 %v628, %v624
    %v965 = vpack.c.b16 %v629, %v625
    %v966 = vpack.c.b16 %v634, %v630
    %v967 = vpack.c.b16 %v635, %v631
    %v968 = vpack.c.b16 %v636, %v632
    %v969 = vpack.c.b16 %v637, %v633
    %v970 = vpack.c.b16 %v642, %v638
    %v971 = vpack.c.b16 %v643, %v639
    %v972 = vpack.c.b16 %v644, %v640
    %v973 = vpack.c.b16 %v645, %v641
    %v974 = vpack.c.b16 %v650, %v646
    %v975 = vpack.c.b16 %v651, %v647
    %v976 = vpack.c.b16 %v652, %v648
    %v977 = vpack.c.b16 %v653, %v649
    %v978 = vpack.c.b16 %v658, %v654
    %v979 = vpack.c.b16 %v659, %v655
    %v980 = vpack.c.b16 %v660, %v656
    %v981 = vpack.c.b16 %v661, %v657
    %v982 = vpack.c.b16 %v666, %v662
    %v983 = vpack.c.b16 %v667, %v663
    %v984 = vpack.c.b16 %v668, %v664
    %v985 = vpack.c.b16 %v669, %v665
    %v986 = vpack.c.b16 %v674, %v670
    %v987 = vpack.c.b16 %v675, %v671
    %v988 = vpack.c.b16 %v676, %v672
    %v989 = vpack.c.b16 %v677, %v673
    %v990 = vpack.c.b16 %v682, %v678
    %v991 = vpack.c.b16 %v683, %v679
    %v992 = vpack.c.b16 %v684, %v680
    %v993 = vpack.c.b16 %v685, %v681
    %v994 = vpack.c.b16 %v690, %v686
    %v995 = vpack.c.b16 %v691, %v687
    %v996 = vpack.c.b16 %v692, %v688
    %v997 = vpack.c.b16 %v693, %v689
    %v998 = vpack.c.b16 %v698, %v694
    %v999 = vpack.c.b16 %v699, %v695
    %v1000 = vpack.c.b16 %v700, %v696
    %v1001 = vpack.c.b16 %v701, %v697
    %v1002 = vpack.c.b16 %v706, %v702
    %v1003 = vpack.c.b16 %v707, %v703
    %v1004 = vpack.c.b16 %v708, %v704
    %v1005 = vpack.c.b16 %v709, %v705
    %v1006 = vpack.c.b16 %v714, %v710
    %v1007 = vpack.c.b16 %v715, %v711
    %v1008 = vpack.c.b16 %v716, %v712
    %v1009 = vpack.c.b16 %v717, %v713
    %v1010 = vpack.c.b16 %v722, %v718
    %v1011 = vpack.c.b16 %v723, %v719
    %v1012 = vpack.c.b16 %v724, %v720
    %v1013 = vpack.c.b16 %v725, %v721
    %v1014 = vpack.c.b16 %v730, %v726
    %v1015 = vpack.c.b16 %v731, %v727
    %v1016 = vpack.c.b16 %v732, %v728
    %v1017 = vpack.c.b16 %v733, %v729
    %v1018 = vpack.c.b16 %v738, %v734
    %v1019 = vpack.c.b16 %v739, %v735
    %v1020 = vpack.c.b16 %v740, %v736
    %v1021 = vpack.c.b16 %v741, %v737
    %v1022 = vpack.c.b16 %v746, %v742
    %v1023 = vpack.c.b16 %v747, %v743
    %v1024 = vpack.c.b16 %v748, %v744
    %v1025 = vpack.c.b16 %v749, %v745
    %v1026 = vpack.c.b16 %v754, %v750
    %v1027 = vpack.c.b16 %v755, %v751
    %v1028 = vpack.c.b16 %v756, %v752
    %v1029 = vpack.c.b16 %v757, %v753
    %v1030 = vpack.c.b16 %v762, %v758
    %v1031 = vpack.c.b16 %v763, %v759
    %v1032 = vpack.c.b16 %v764, %v760
    %v1033 = vpack.c.b16 %v765, %v761
    %v1034 = vpack.c.b16 %v770, %v766
    %v1035 = vpack.c.b16 %v771, %v767
    %v1036 = vpack.c.b16 %v772, %v768
    %v1037 = vpack.c.b16 %v773, %v769
    %v1038 = vpack.c.b16 %v778, %v774
    %v1039 = vpack.c.b16 %v779, %v775
    %v1040 = vpack.c.b16 %v780, %v776
    %v1041 = vpack.c.b16 %v781, %v777
    %v1042 = vpack.c.b16 %v786, %v782
    %v1043 = vpack.c.b16 %v787, %v783
    %v1044 = vpack.c.b16 %v788, %v784
    %v1045 = vpack.c.b16 %v789, %v785
    %v1046 = vpack.c.b16 %v794, %v790
    %v1047 = vpack.c.b16 %v795, %v791
    %v1048 = vpack.c.b16 %v796, %v792
    %v1049 = vpack.c.b16 %v797, %v793
    %v1050 = vpack.c.b16 %v802, %v798
    %v1051 = vpack.c.b16 %v803, %v799
    %v1052 = vpack.c.b16 %v804, %v800
    %v1053 = vpack.c.b16 %v805, %v801
    %v1054 = vpack.c.b16 %v810, %v806
    %v1055 = vpack.c.b16 %v811, %v807
    %v1056 = vpack.c.b16 %v812, %v808
    %v1057 = vpack.c.b16 %v813, %v809
    %v1058 = vpack.c.b16 %v818, %v814
    %v1059 = vpack.c.b16 %v819, %v815
    %v1060 = vpack.c.b16 %v820, %v816
    %v1061 = vpack.c.b16 %v821, %v817
    %v1062 = vpack.c.b16 %v826, %v822
    %v1063 = vpack.c.b16 %v827, %v823
    %v1064 = vpack.c.b16 %v828, %v824
    %v1065 = vpack.c.b16 %v829, %v825
    %v1066 = vpack.c.b16 %v834, %v830
    %v1067 = vpack.c.b16 %v835, %v831
    %v1068 = vpack.c.b16 %v836, %v832
    %v1069 = vpack.c.b16 %v837, %v833
    %v1070 = vpack.c.b16 %v842, %v838
    %v1071 = vpack.c.b16 %v843, %v839
    %v1072 = vpack.c.b16 %v844, %v840
    %v1073 = vpack.c.b16 %v845, %v841
    %v1074 = vpack.c.b16 %v850, %v846
    %v1075 = vpack.c.b16 %v851, %v847
    %v1076 = vpack.c.b16 %v852, %v848
    %v1077 = vpack.c.b16 %v853, %v849
    %v1078 = vpack.c.b16 %v858, %v854
    %v1079 = vpack.c.b16 %v859, %v855
    %v1080 = vpack.c.b16 %v860, %v856
    %v1081 = vpack.c.b16 %v861, %v857
    %v1082 = vpack.c.b16 %v866, %v862
    %v1083 = vpack.c.b16 %v867, %v863
    %v1084 = vpack.c.b16 %v868, %v864
    %v1085 = vpack.c.b16 %v869, %v865
    %v1086 = vpack.c.b16 %v874, %v870
    %v1087 = vpack.c.b16 %v875, %v871
    %v1088 = vpack.c.b16 %v876, %v872
    %v1089 = vpack.c.b16 %v877, %v873
    %v1090 = vpack.c.b16 %v882, %v878
    %v1091 = vpack.c.b16 %v883, %v879
    %v1092 = vpack.c.b16 %v884, %v880
    %v1093 = vpack.c.b16 %v885, %v881
    %v1094 = vpack.c.b16 %v890, %v886
    %v1095 = vpack.c.b16 %v891, %v887
    %v1096 = vpack.c.b16 %v892, %v888
    %v1097 = vpack.c.b16 %v893, %v889
    %v1098 = vpack.c.b16 %v898, %v894
    %v1099 = vpack.c.b16 %v899, %v895
    %v1100 = vpack.c.b16 %v900, %v896
    %v1101 = vpack.c.b16 %v901, %v897
    %v1102 = vpack.c.b16 %v906, %v902
    %v1103 = vpack.c.b16 %v907, %v903
    %v1104 = vpack.c.b16 %v908, %v904
    %v1105 = vpack.c.b16 %v909, %v905
    %vm1302 = vcmask 130048
    %v1304 = vsel %vm1302, %v103, 0
    %1306 = vmatprep.subr.bf16.mxu0 %v911
    %1307 = vmatpush1.bf16.msra.mxu0 %v910
    %1308 = vmatprep.subr.bf16.mxu0 %v915
    %1309 = vmatpush1.bf16.msra.mxu0 %v914
    %1310 = vmatprep.subr.bf16.mxu0 %v919
    %1311 = vmatpush1.bf16.msra.mxu0 %v918
    %1312 = vmatprep.subr.bf16.mxu0 %v923
    %1313 = vmatpush1.bf16.msra.mxu0 %v922
    %1314 = vmatprep.subr.bf16.mxu0 %v927
    %1315 = vmatpush1.bf16.msra.mxu0 %v926
    %1316 = vmatprep.subr.bf16.mxu0 %v931
    %1317 = vmatpush1.bf16.msra.mxu0 %v930
    %1318 = vmatprep.subr.bf16.mxu0 %v935
    %1319 = vmatpush1.bf16.msra.mxu0 %v934
    %1320 = vmatprep.subr.bf16.mxu0 %v939
    %1321 = vmatpush1.bf16.msra.mxu0 %v938
    %1322 = vmatprep.subr.bf16.mxu0 %v943
    %1323 = vmatpush1.bf16.msra.mxu0 %v942
    %1324 = vmatprep.subr.bf16.mxu0 %v947
    %1325 = vmatpush1.bf16.msra.mxu0 %v946
    %1326 = vmatprep.subr.bf16.mxu0 %v951
    %1327 = vmatpush1.bf16.msra.mxu0 %v950
    %1328 = vmatprep.subr.bf16.mxu0 %v955
    %1329 = vmatpush1.bf16.msra.mxu0 %v954
    %1330 = vmatprep.subr.bf16.mxu0 %v959
    %1331 = vmatpush1.bf16.msra.mxu0 %v958
    %1332 = vmatprep.subr.bf16.mxu0 %v963
    %1333 = vmatpush1.bf16.msra.mxu0 %v962
    %1334 = vmatprep.subr.bf16.mxu0 %v967
    %1335 = vmatpush1.bf16.msra.mxu0 %v966
    %1336 = vmatprep.subr.bf16.mxu0 %v971
    %1337 = vmatpush1.bf16.msra.mxu0 %v970
    %1338 = vmatprep.mubr.bf16.mxu0 %v98
    %1339 = vmatmul.mubr.bf16.gmra.mrb[0].mxu0 %v97
    %v1340 = vpop.f32.mrb[0].mxu0
    %v1341 = vadd.f32 %v305, %v1340
    %v1342 = vpop.f32.mrb[0].mxu0
    %v1343 = vadd.f32 %v309, %v1342
    %v1344 = vpop.f32.mrb[0].mxu0
    %v1345 = vadd.f32 %v305, %v1344
    %v1346 = vpop.f32.mrb[0].mxu0
    %v1347 = vadd.f32 %v309, %v1346
    %1348 = vdwg.mxu0
    %1349 = vmatprep.subr.bf16.mxu0 %v975
    %1350 = vmatpush1.bf16.msra.mxu0 %v974
    %1351 = vmatprep.subr.bf16.mxu0 %v979
    %1352 = vmatpush1.bf16.msra.mxu0 %v978
    %1353 = vmatprep.subr.bf16.mxu0 %v983
    %1354 = vmatpush1.bf16.msra.mxu0 %v982
    %1355 = vmatprep.subr.bf16.mxu0 %v987
    %1356 = vmatpush1.bf16.msra.mxu0 %v986
    %1357 = vmatprep.subr.bf16.mxu0 %v991
    %1358 = vmatpush1.bf16.msra.mxu0 %v990
    %1359 = vmatprep.subr.bf16.mxu0 %v995
    %1360 = vmatpush1.bf16.msra.mxu0 %v994
    %1361 = vmatprep.subr.bf16.mxu0 %v999
    %1362 = vmatpush1.bf16.msra.mxu0 %v998
    %1363 = vmatprep.subr.bf16.mxu0 %v1003
    %1364 = vmatpush1.bf16.msra.mxu0 %v1002
    %1365 = vmatprep.subr.bf16.mxu0 %v1007
    %1366 = vmatpush1.bf16.msra.mxu0 %v1006
    %1367 = vmatprep.subr.bf16.mxu0 %v1011
    %1368 = vmatpush1.bf16.msra.mxu0 %v1010
    %1369 = vmatprep.subr.bf16.mxu0 %v1015
    %1370 = vmatpush1.bf16.msra.mxu0 %v1014
    %1371 = vmatprep.subr.bf16.mxu0 %v1019
    %1372 = vmatpush1.bf16.msra.mxu0 %v1018
    %1373 = vmatprep.subr.bf16.mxu0 %v1023
    %1374 = vmatpush1.bf16.msra.mxu0 %v1022
    %1375 = vmatprep.subr.bf16.mxu0 %v1027
    %1376 = vmatpush1.bf16.msra.mxu0 %v1026
    %1377 = vmatprep.subr.bf16.mxu0 %v1031
    %1378 = vmatpush1.bf16.msra.mxu0 %v1030
    %1379 = vmatprep.subr.bf16.mxu0 %v1035
    %1380 = vmatpush1.bf16.msra.mxu0 %v1034
    %1381 = vmatprep.mubr.bf16.mxu0 %v100
    %1382 = vmatmul.mubr.bf16.gmra.mrb[0].mxu0 %v99
    %v1383 = vpop.f32.mrb[0].mxu0
    %v1384 = vadd.f32 %v1341, %v1383
    %v1385 = vpop.f32.mrb[0].mxu0
    %v1386 = vadd.f32 %v1343, %v1385
    %v1387 = vpop.f32.mrb[0].mxu0
    %v1388 = vadd.f32 %v1345, %v1387
    %v1389 = vpop.f32.mrb[0].mxu0
    %v1390 = vadd.f32 %v1347, %v1389
    %1391 = vdwg.mxu0
    %1392 = vmatprep.subr.bf16.mxu0 %v1039
    %1393 = vmatpush1.bf16.msra.mxu0 %v1038
    %1394 = vmatprep.subr.bf16.mxu0 %v1043
    %1395 = vmatpush1.bf16.msra.mxu0 %v1042
    %1396 = vmatprep.subr.bf16.mxu0 %v1047
    %1397 = vmatpush1.bf16.msra.mxu0 %v1046
    %1398 = vmatprep.subr.bf16.mxu0 %v1051
    %1399 = vmatpush1.bf16.msra.mxu0 %v1050
    %1400 = vmatprep.subr.bf16.mxu0 %v1055
    %1401 = vmatpush1.bf16.msra.mxu0 %v1054
    %1402 = vmatprep.subr.bf16.mxu0 %v1059
    %1403 = vmatpush1.bf16.msra.mxu0 %v1058
    %1404 = vmatprep.subr.bf16.mxu0 %v1063
    %1405 = vmatpush1.bf16.msra.mxu0 %v1062
    %1406 = vmatprep.subr.bf16.mxu0 %v1067
    %1407 = vmatpush1.bf16.msra.mxu0 %v1066
    %1408 = vmatprep.subr.bf16.mxu0 %v1071
    %1409 = vmatpush1.bf16.msra.mxu0 %v1070
    %1410 = vmatprep.subr.bf16.mxu0 %v1075
    %1411 = vmatpush1.bf16.msra.mxu0 %v1074
    %1412 = vmatprep.subr.bf16.mxu0 %v1079
    %1413 = vmatpush1.bf16.msra.mxu0 %v1078
    %1414 = vmatprep.subr.bf16.mxu0 %v1083
    %1415 = vmatpush1.bf16.msra.mxu0 %v1082
    %1416 = vmatprep.subr.bf16.mxu0 %v1087
    %1417 = vmatpush1.bf16.msra.mxu0 %v1086
    %1418 = vmatprep.subr.bf16.mxu0 %v1091
    %1419 = vmatpush1.bf16.msra.mxu0 %v1090
    %1420 = vmatprep.subr.bf16.mxu0 %v1095
    %1421 = vmatpush1.bf16.msra.mxu0 %v1094
    %1422 = vmatprep.subr.bf16.mxu0 %v1099
    %1423 = vmatpush1.bf16.msra.mxu0 %v1098
    %1424 = vmatprep.mubr.bf16.mxu0 %v102
    %1425 = vmatmul.mubr.bf16.gmra.mrb[0].mxu0 %v101
    %v1426 = vpop.f32.mrb[0].mxu0
    %v1427 = vadd.f32 %v1384, %v1426
    %v1428 = vpop.f32.mrb[0].mxu0
    %v1429 = vadd.f32 %v1386, %v1428
    %v1430 = vpop.f32.mrb[0].mxu0
    %v1431 = vadd.f32 %v1388, %v1430
    %v1432 = vpop.f32.mrb[0].mxu0
    %v1433 = vadd.f32 %v1390, %v1432
    %1434 = vdwg.mxu0
    %1435 = vmatprep.subr.bf16.mxu0 %v1103
    %1436 = vmatpush1.bf16.msra.mxu0 %v1102
    %1437 = vmatprep.subr.bf16.mxu0 0
    %1438 = vmatpush1.bf16.msra.mxu0 0
    %1439 = vmatprep.subr.bf16.mxu0 0
    %1440 = vmatpush1.bf16.msra.mxu0 0
    %1441 = vmatprep.subr.bf16.mxu0 0
    %1442 = vmatpush1.bf16.msra.mxu0 0
    %1443 = vmatprep.subr.bf16.mxu0 0
    %1444 = vmatpush1.bf16.msra.mxu0 0
    %1445 = vmatprep.subr.bf16.mxu0 0
    %1446 = vmatpush1.bf16.msra.mxu0 0
    %1447 = vmatprep.subr.bf16.mxu0 0
    %1448 = vmatpush1.bf16.msra.mxu0 0
    %1449 = vmatprep.subr.bf16.mxu0 0
    %1450 = vmatpush1.bf16.msra.mxu0 0
    %1451 = vmatprep.subr.bf16.mxu0 0
    %1452 = vmatpush1.bf16.msra.mxu0 0
    %1453 = vmatprep.subr.bf16.mxu0 0
    %1454 = vmatpush1.bf16.msra.mxu0 0
    %1455 = vmatprep.subr.bf16.mxu0 0
    %1456 = vmatpush1.bf16.msra.mxu0 0
    %1457 = vmatprep.subr.bf16.mxu0 0
    %1458 = vmatpush1.bf16.msra.mxu0 0
    %1459 = vmatprep.subr.bf16.mxu0 0
    %1460 = vmatpush1.bf16.msra.mxu0 0
    %1461 = vmatprep.subr.bf16.mxu0 0
    %1462 = vmatpush1.bf16.msra.mxu0 0
    %1463 = vmatprep.subr.bf16.mxu0 0
    %1464 = vmatpush1.bf16.msra.mxu0 0
    %1465 = vmatprep.subr.bf16.mxu0 0
    %1466 = vmatpush1.bf16.msra.mxu0 0
    %1467 = vmatprep.mubr.bf16.mxu0 0
    %1468 = vmatmul.mubr.bf16.gmra.mrb[0].mxu0 %v1304
    %v1469 = vpop.f32.mrb[0].mxu0
    %v1470 = vadd.f32 %v1427, %v1469
    %v1471 = vpop.f32.mrb[0].mxu0
    %v1472 = vadd.f32 %v1429, %v1471
    %v1473 = vpop.f32.mrb[0].mxu0
    %v1474 = vadd.f32 %v1431, %v1473
    %v1475 = vpop.f32.mrb[0].mxu0
    %v1476 = vadd.f32 %v1433, %v1475
    %1477 = vdwg.mxu0
    %1478 = vmatprep.subr.bf16.mxu0 %v913
    %1479 = vmatpush1.bf16.msra.mxu0 %v912
    %1480 = vmatprep.subr.bf16.mxu0 %v917
    %1481 = vmatpush1.bf16.msra.mxu0 %v916
    %1482 = vmatprep.subr.bf16.mxu0 %v921
    %1483 = vmatpush1.bf16.msra.mxu0 %v920
    %1484 = vmatprep.subr.bf16.mxu0 %v925
    %1485 = vmatpush1.bf16.msra.mxu0 %v924
    %1486 = vmatprep.subr.bf16.mxu0 %v929
    %1487 = vmatpush1.bf16.msra.mxu0 %v928
    %1488 = vmatprep.subr.bf16.mxu0 %v933
    %1489 = vmatpush1.bf16.msra.mxu0 %v932
    %1490 = vmatprep.subr.bf16.mxu0 %v937
    %1491 = vmatpush1.bf16.msra.mxu0 %v936
    %1492 = vmatprep.subr.bf16.mxu0 %v941
    %1493 = vmatpush1.bf16.msra.mxu0 %v940
    %1494 = vmatprep.subr.bf16.mxu0 %v945
    %1495 = vmatpush1.bf16.msra.mxu0 %v944
    %1496 = vmatprep.subr.bf16.mxu0 %v949
    %1497 = vmatpush1.bf16.msra.mxu0 %v948
    %1498 = vmatprep.subr.bf16.mxu0 %v953
    %1499 = vmatpush1.bf16.msra.mxu0 %v952
    %1500 = vmatprep.subr.bf16.mxu0 %v957
    %1501 = vmatpush1.bf16.msra.mxu0 %v956
    %1502 = vmatprep.subr.bf16.mxu0 %v961
    %1503 = vmatpush1.bf16.msra.mxu0 %v960
    %1504 = vmatprep.subr.bf16.mxu0 %v965
    %1505 = vmatpush1.bf16.msra.mxu0 %v964
    %1506 = vmatprep.subr.bf16.mxu0 %v969
    %1507 = vmatpush1.bf16.msra.mxu0 %v968
    %1508 = vmatprep.subr.bf16.mxu0 %v973
    %1509 = vmatpush1.bf16.msra.mxu0 %v972
    %1510 = vmatprep.mubr.bf16.mxu0 %v98
    %1511 = vmatmul.mubr.bf16.gmra.mrb[0].mxu0 %v97
    %v1512 = vpop.f32.mrb[0].mxu0
    %v1513 = vadd.f32 %v313, %v1512
    %v1514 = vpop.f32.mrb[0].mxu0
    %v1515 = vadd.f32 %v317, %v1514
    %v1516 = vpop.f32.mrb[0].mxu0
    %v1517 = vadd.f32 %v313, %v1516
    %v1518 = vpop.f32.mrb[0].mxu0
    %v1519 = vadd.f32 %v317, %v1518
    %1520 = vdwg.mxu0
    %1521 = vmatprep.subr.bf16.mxu0 %v977
    %1522 = vmatpush1.bf16.msra.mxu0 %v976
    %1523 = vmatprep.subr.bf16.mxu0 %v981
    %1524 = vmatpush1.bf16.msra.mxu0 %v980
    %1525 = vmatprep.subr.bf16.mxu0 %v985
    %1526 = vmatpush1.bf16.msra.mxu0 %v984
    %1527 = vmatprep.subr.bf16.mxu0 %v989
    %1528 = vmatpush1.bf16.msra.mxu0 %v988
    %1529 = vmatprep.subr.bf16.mxu0 %v993
    %1530 = vmatpush1.bf16.msra.mxu0 %v992
    %1531 = vmatprep.subr.bf16.mxu0 %v997
    %1532 = vmatpush1.bf16.msra.mxu0 %v996
    %1533 = vmatprep.subr.bf16.mxu0 %v1001
    %1534 = vmatpush1.bf16.msra.mxu0 %v1000
    %1535 = vmatprep.subr.bf16.mxu0 %v1005
    %1536 = vmatpush1.bf16.msra.mxu0 %v1004
    %1537 = vmatprep.subr.bf16.mxu0 %v1009
    %1538 = vmatpush1.bf16.msra.mxu0 %v1008
    %1539 = vmatprep.subr.bf16.mxu0 %v1013
    %1540 = vmatpush1.bf16.msra.mxu0 %v1012
    %1541 = vmatprep.subr.bf16.mxu0 %v1017
    %1542 = vmatpush1.bf16.msra.mxu0 %v1016
    %1543 = vmatprep.subr.bf16.mxu0 %v1021
    %1544 = vmatpush1.bf16.msra.mxu0 %v1020
    %1545 = vmatprep.subr.bf16.mxu0 %v1025
    %1546 = vmatpush1.bf16.msra.mxu0 %v1024
    %1547 = vmatprep.subr.bf16.mxu0 %v1029
    %1548 = vmatpush1.bf16.msra.mxu0 %v1028
    %1549 = vmatprep.subr.bf16.mxu0 %v1033
    %1550 = vmatpush1.bf16.msra.mxu0 %v1032
    %1551 = vmatprep.subr.bf16.mxu0 %v1037
    %1552 = vmatpush1.bf16.msra.mxu0 %v1036
    %1553 = vmatprep.mubr.bf16.mxu0 %v100
    %1554 = vmatmul.mubr.bf16.gmra.mrb[0].mxu0 %v99
    %v1555 = vpop.f32.mrb[0].mxu0
    %v1556 = vadd.f32 %v1513, %v1555
    %v1557 = vpop.f32.mrb[0].mxu0
    %v1558 = vadd.f32 %v1515, %v1557
    %v1559 = vpop.f32.mrb[0].mxu0
    %v1560 = vadd.f32 %v1517, %v1559
    %v1561 = vpop.f32.mrb[0].mxu0
    %v1562 = vadd.f32 %v1519, %v1561
    %1563 = vdwg.mxu0
    %1564 = vmatprep.subr.bf16.mxu0 %v1041
    %1565 = vmatpush1.bf16.msra.mxu0 %v1040
    %1566 = vmatprep.subr.bf16.mxu0 %v1045
    %1567 = vmatpush1.bf16.msra.mxu0 %v1044
    %1568 = vmatprep.subr.bf16.mxu0 %v1049
    %1569 = vmatpush1.bf16.msra.mxu0 %v1048
    %1570 = vmatprep.subr.bf16.mxu0 %v1053
    %1571 = vmatpush1.bf16.msra.mxu0 %v1052
    %1572 = vmatprep.subr.bf16.mxu0 %v1057
    %1573 = vmatpush1.bf16.msra.mxu0 %v1056
    %1574 = vmatprep.subr.bf16.mxu0 %v1061
    %1575 = vmatpush1.bf16.msra.mxu0 %v1060
    %1576 = vmatprep.subr.bf16.mxu0 %v1065
    %1577 = vmatpush1.bf16.msra.mxu0 %v1064
    %1578 = vmatprep.subr.bf16.mxu0 %v1069
    %1579 = vmatpush1.bf16.msra.mxu0 %v1068
    %1580 = vmatprep.subr.bf16.mxu0 %v1073
    %1581 = vmatpush1.bf16.msra.mxu0 %v1072
    %1582 = vmatprep.subr.bf16.mxu0 %v1077
    %1583 = vmatpush1.bf16.msra.mxu0 %v1076
    %1584 = vmatprep.subr.bf16.mxu0 %v1081
    %1585 = vmatpush1.bf16.msra.mxu0 %v1080
    %1586 = vmatprep.subr.bf16.mxu0 %v1085
    %1587 = vmatpush1.bf16.msra.mxu0 %v1084
    %1588 = vmatprep.subr.bf16.mxu0 %v1089
    %1589 = vmatpush1.bf16.msra.mxu0 %v1088
    %1590 = vmatprep.subr.bf16.mxu0 %v1093
    %1591 = vmatpush1.bf16.msra.mxu0 %v1092
    %1592 = vmatprep.subr.bf16.mxu0 %v1097
    %1593 = vmatpush1.bf16.msra.mxu0 %v1096
    %1594 = vmatprep.subr.bf16.mxu0 %v1101
    %1595 = vmatpush1.bf16.msra.mxu0 %v1100
    %1596 = vmatprep.mubr.bf16.mxu0 %v102
    %1597 = vmatmul.mubr.bf16.gmra.mrb[0].mxu0 %v101
    %v1598 = vpop.f32.mrb[0].mxu0
    %v1599 = vadd.f32 %v1556, %v1598
    %v1600 = vpop.f32.mrb[0].mxu0
    %v1601 = vadd.f32 %v1558, %v1600
    %v1602 = vpop.f32.mrb[0].mxu0
    %v1603 = vadd.f32 %v1560, %v1602
    %v1604 = vpop.f32.mrb[0].mxu0
    %v1605 = vadd.f32 %v1562, %v1604
    %1606 = vdwg.mxu0
    %1607 = vmatprep.subr.bf16.mxu0 %v1105
    %1608 = vmatpush1.bf16.msra.mxu0 %v1104
    %1609 = vmatprep.subr.bf16.mxu0 0
    %1610 = vmatpush1.bf16.msra.mxu0 0
    %1611 = vmatprep.subr.bf16.mxu0 0
    %1612 = vmatpush1.bf16.msra.mxu0 0
    %1613 = vmatprep.subr.bf16.mxu0 0
    %1614 = vmatpush1.bf16.msra.mxu0 0
    %1615 = vmatprep.subr.bf16.mxu0 0
    %1616 = vmatpush1.bf16.msra.mxu0 0
    %1617 = vmatprep.subr.bf16.mxu0 0
    %1618 = vmatpush1.bf16.msra.mxu0 0
    %1619 = vmatprep.subr.bf16.mxu0 0
    %1620 = vmatpush1.bf16.msra.mxu0 0
    %1621 = vmatprep.subr.bf16.mxu0 0
    %1622 = vmatpush1.bf16.msra.mxu0 0
    %1623 = vmatprep.subr.bf16.mxu0 0
    %1624 = vmatpush1.bf16.msra.mxu0 0
    %1625 = vmatprep.subr.bf16.mxu0 0
    %1626 = vmatpush1.bf16.msra.mxu0 0
    %1627 = vmatprep.subr.bf16.mxu0 0
    %1628 = vmatpush1.bf16.msra.mxu0 0
    %1629 = vmatprep.subr.bf16.mxu0 0
    %1630 = vmatpush1.bf16.msra.mxu0 0
    %1631 = vmatprep.subr.bf16.mxu0 0
    %1632 = vmatpush1.bf16.msra.mxu0 0
    %1633 = vmatprep.subr.bf16.mxu0 0
    %1634 = vmatpush1.bf16.msra.mxu0 0
    %1635 = vmatprep.subr.bf16.mxu0 0
    %1636 = vmatpush1.bf16.msra.mxu0 0
    %1637 = vmatprep.subr.bf16.mxu0 0
    %1638 = vmatpush1.bf16.msra.mxu0 0
    %1639 = vmatprep.mubr.bf16.mxu0 0
    %1640 = vmatmul.mubr.bf16.gmra.mrb[0].mxu0 %v1304
    %v1641 = vpop.f32.mrb[0].mxu0
    %v1642 = vadd.f32 %v1599, %v1641
    %v1643 = vpop.f32.mrb[0].mxu0
    %v1644 = vadd.f32 %v1601, %v1643
    %v1645 = vpop.f32.mrb[0].mxu0
    %v1646 = vadd.f32 %v1603, %v1645
    %v1647 = vpop.f32.mrb[0].mxu0
    %v1648 = vadd.f32 %v1605, %v1647
    %1649 = vdwg.mxu0
    %vm1650 = vcmp.gt.f32.partialorder %v1470, 0.0
    %vm1651 = vcmp.gt.f32.partialorder %v1472, 0.0
    %vm1652 = vcmp.gt.f32.partialorder %v1642, 0.0
    %vm1653 = vcmp.gt.f32.partialorder %v1644, 0.0
    %vm1654 = vcmp.gt.f32.partialorder %v1474, 0.0
    %vm1655 = vcmp.gt.f32.partialorder %v1476, 0.0
    %vm1656 = vcmp.gt.f32.partialorder %v1646, 0.0
    %vm1657 = vcmp.gt.f32.partialorder %v1648, 0.0
    %v1658 = vmul.f32 %v1470, 0.01
    %v1659 = vmul.f32 %v1472, 0.01
    %v1660 = vmul.f32 %v1642, 0.01
    %v1661 = vmul.f32 %v1644, 0.01
    %v1662 = vmul.f32 %v1474, 0.01
    %v1663 = vmul.f32 %v1476, 0.01
    %v1664 = vmul.f32 %v1646, 0.01
    %v1665 = vmul.f32 %v1648, 0.01
    %v1666 = vsel %vm1650, %v1470, %v1658
    %v1667 = vsel %vm1651, %v1472, %v1659
    %v1668 = vsel %vm1652, %v1642, %v1660
    %v1669 = vsel %vm1653, %v1644, %v1661
    %v1670 = vsel %vm1654, %v1474, %v1662
    %v1671 = vsel %vm1655, %v1476, %v1663
    %v1672 = vsel %vm1656, %v1646, %v1664
    %v1673 = vsel %vm1657, %v1648, %v1665
    %v1674 = vpack.c.bf16 %v1670, %v1666
    %v1675 = vpack.c.bf16 %v1671, %v1667
    %v1676 = vpack.c.bf16 %v1672, %v1668
    %v1677 = vpack.c.bf16 %v1673, %v1669
    %v1678 = vld [vmem:[#allocation7] sm:$0xff]
    %v1679 = vld [vmem:[#allocation7 + $0x8] sm:$0xff]
    %v1680 = vld [vmem:[#allocation7 + $0x10] sm:$0xff]
    %v1681 = vld [vmem:[#allocation7 + $0x18] sm:$0xff]
    %v1682 = vld [vmem:[#allocation7 + $0x20] sm:$0xff]
    %v1683 = vld [vmem:[#allocation7 + $0x28] sm:$0xff]
    %v1684 = vld [vmem:[#allocation7 + $0x30] sm:$0xff]
    %v1685 = vld [vmem:[#allocation7 + $0x38] sm:$0xff]
    %v1686 = vld [vmem:[#allocation7 + $0x40] sm:$0xff]
    %v1687 = vld [vmem:[#allocation7 + $0x48] sm:$0xff]
    %v1688 = vld [vmem:[#allocation7 + $0x50] sm:$0xff]
    %v1689 = vld [vmem:[#allocation7 + $0x58] sm:$0xff]
    %v1690 = vld [vmem:[#allocation7 + $0x60] sm:$0xff]
    %v1691 = vld [vmem:[#allocation7 + $0x68] sm:$0xff]
    %v1692 = vld [vmem:[#allocation7 + $0x70] sm:$0xff]
    %v1693 = vld [vmem:[#allocation7 + $0x78] sm:$0xff]
    %v1694 = vld [vmem:[#allocation7 + $0x80] sm:$0xff]
    %v1695 = vld [vmem:[#allocation7 + $0x88] sm:$0xff]
    %v1696 = vld [vmem:[#allocation7 + $0x90] sm:$0xff]
    %v1697 = vld [vmem:[#allocation7 + $0x98] sm:$0xff]
    %v1698 = vld [vmem:[#allocation7 + $0xa0] sm:$0xff]
    %v1699 = vld [vmem:[#allocation7 + $0xa8] sm:$0xff]
    %v1700 = vld [vmem:[#allocation7 + $0xb0] sm:$0xff]
    %v1701 = vld [vmem:[#allocation7 + $0xb8] sm:$0xff]
    %v1702 = vld [vmem:[#allocation7 + $0xc0] sm:$0xff]
    %v1703 = vld [vmem:[#allocation7 + $0xc8] sm:$0xff]
    %v1704 = vld [vmem:[#allocation7 + $0xd0] sm:$0xff]
    %v1705 = vld [vmem:[#allocation7 + $0xd8] sm:$0xff]
    %v1706 = vld [vmem:[#allocation7 + $0xe0] sm:$0xff]
    %v1707 = vld [vmem:[#allocation7 + $0xe8] sm:$0xff]
    %v1708 = vld [vmem:[#allocation7 + $0xf0] sm:$0xff]
    %v1709 = vld [vmem:[#allocation7 + $0xf8] sm:$0xff]
    %v1710 = vld [vmem:[#allocation7 + $0x100] sm:$0xff]
    %v1711 = vld [vmem:[#allocation7 + $0x108] sm:$0xff]
    %v1712 = vld [vmem:[#allocation7 + $0x110] sm:$0xff]
    %v1713 = vld [vmem:[#allocation7 + $0x118] sm:$0xff]
    %v1714 = vld [vmem:[#allocation7 + $0x120] sm:$0xff]
    %v1715 = vld [vmem:[#allocation7 + $0x128] sm:$0xff]
    %v1716 = vld [vmem:[#allocation7 + $0x130] sm:$0xff]
    %v1717 = vld [vmem:[#allocation7 + $0x138] sm:$0xff]
    %v1718 = vld [vmem:[#allocation7 + $0x140] sm:$0xff]
    %v1719 = vld [vmem:[#allocation7 + $0x148] sm:$0xff]
    %v1720 = vld [vmem:[#allocation7 + $0x150] sm:$0xff]
    %v1721 = vld [vmem:[#allocation7 + $0x158] sm:$0xff]
    %v1722 = vld [vmem:[#allocation7 + $0x160] sm:$0xff]
    %v1723 = vld [vmem:[#allocation7 + $0x168] sm:$0xff]
    %v1724 = vld [vmem:[#allocation7 + $0x170] sm:$0xff]
    %v1725 = vld [vmem:[#allocation7 + $0x178] sm:$0xff]
    %v1726 = vld [vmem:[#allocation7 + $0x180] sm:$0xff]
    %v1727 = vld [vmem:[#allocation7 + $0x188] sm:$0xff]
    %v1728 = vld [vmem:[#allocation7 + $0x190] sm:$0xff]
    %v1729 = vld [vmem:[#allocation7 + $0x198] sm:$0xff]
    %v1730 = vld [vmem:[#allocation7 + $0x1a0] sm:$0xff]
    %v1731 = vld [vmem:[#allocation7 + $0x1a8] sm:$0xff]
    %v1732 = vld [vmem:[#allocation7 + $0x1b0] sm:$0xff]
    %v1733 = vld [vmem:[#allocation7 + $0x1b8] sm:$0xff]
    %v1734 = vld [vmem:[#allocation7 + $0x1c0] sm:$0xff]
    %v1735 = vld [vmem:[#allocation7 + $0x1c8] sm:$0xff]
    %v1736 = vld [vmem:[#allocation7 + $0x1d0] sm:$0xff]
    %v1737 = vld [vmem:[#allocation7 + $0x1d8] sm:$0xff]
    %v1738 = vld [vmem:[#allocation7 + $0x1e0] sm:$0xff]
    %v1739 = vld [vmem:[#allocation7 + $0x1e8] sm:$0xff]
    %v1740 = vld [vmem:[#allocation7 + $0x1f0] sm:$0xff]
    %v1741 = vld [vmem:[#allocation7 + $0x1f8] sm:$0xff]
    %v1742 = vld [vmem:[%s4] sm:$0x3]
    %v1744 = vlaneseq
    %v1745 = vshrl.u32 %v1744, 7
    %v1746 = vsub.s32 0, %v1745
    %v1747 = vrot.slane %v1742, %v1746
    %v1748 = vlaneseq
    %v1749 = vshrl.u32 %v1748, 7
    %v1750 = vsub.s32 1, %v1749
    %v1751 = vrot.slane %v1742, %v1750
    %v1818 = vunpack.c.l.b16 %v1678
    %v1819 = vunpack.c.h.b16 %v1678
    %v1820 = vunpack.c.l.b16 %v1679
    %v1821 = vunpack.c.h.b16 %v1679
    %v1822 = vunpack.c.l.b16 %v1680
    %v1823 = vunpack.c.h.b16 %v1680
    %v1824 = vunpack.c.l.b16 %v1681
    %v1825 = vunpack.c.h.b16 %v1681
    %v1826 = vunpack.c.l.b16 %v1682
    %v1827 = vunpack.c.h.b16 %v1682
    %v1828 = vunpack.c.l.b16 %v1683
    %v1829 = vunpack.c.h.b16 %v1683
    %v1830 = vunpack.c.l.b16 %v1684
    %v1831 = vunpack.c.h.b16 %v1684
    %v1832 = vunpack.c.l.b16 %v1685
    %v1833 = vunpack.c.h.b16 %v1685
    %v1834 = vunpack.c.l.b16 %v1686
    %v1835 = vunpack.c.h.b16 %v1686
    %v1836 = vunpack.c.l.b16 %v1687
    %v1837 = vunpack.c.h.b16 %v1687
    %v1838 = vunpack.c.l.b16 %v1688
    %v1839 = vunpack.c.h.b16 %v1688
    %v1840 = vunpack.c.l.b16 %v1689
    %v1841 = vunpack.c.h.b16 %v1689
    %v1842 = vunpack.c.l.b16 %v1690
    %v1843 = vunpack.c.h.b16 %v1690
    %v1844 = vunpack.c.l.b16 %v1691
    %v1845 = vunpack.c.h.b16 %v1691
    %v1846 = vunpack.c.l.b16 %v1692
    %v1847 = vunpack.c.h.b16 %v1692
    %v1848 = vunpack.c.l.b16 %v1693
    %v1849 = vunpack.c.h.b16 %v1693
    %v1850 = vunpack.c.l.b16 %v1694
    %v1851 = vunpack.c.h.b16 %v1694
    %v1852 = vunpack.c.l.b16 %v1695
    %v1853 = vunpack.c.h.b16 %v1695
    %v1854 = vunpack.c.l.b16 %v1696
    %v1855 = vunpack.c.h.b16 %v1696
    %v1856 = vunpack.c.l.b16 %v1697
    %v1857 = vunpack.c.h.b16 %v1697
    %v1858 = vunpack.c.l.b16 %v1698
    %v1859 = vunpack.c.h.b16 %v1698
    %v1860 = vunpack.c.l.b16 %v1699
    %v1861 = vunpack.c.h.b16 %v1699
    %v1862 = vunpack.c.l.b16 %v1700
    %v1863 = vunpack.c.h.b16 %v1700
    %v1864 = vunpack.c.l.b16 %v1701
    %v1865 = vunpack.c.h.b16 %v1701
    %v1866 = vunpack.c.l.b16 %v1702
    %v1867 = vunpack.c.h.b16 %v1702
    %v1868 = vunpack.c.l.b16 %v1703
    %v1869 = vunpack.c.h.b16 %v1703
    %v1870 = vunpack.c.l.b16 %v1704
    %v1871 = vunpack.c.h.b16 %v1704
    %v1872 = vunpack.c.l.b16 %v1705
    %v1873 = vunpack.c.h.b16 %v1705
    %v1874 = vunpack.c.l.b16 %v1706
    %v1875 = vunpack.c.h.b16 %v1706
    %v1876 = vunpack.c.l.b16 %v1707
    %v1877 = vunpack.c.h.b16 %v1707
    %v1878 = vunpack.c.l.b16 %v1708
    %v1879 = vunpack.c.h.b16 %v1708
    %v1880 = vunpack.c.l.b16 %v1709
    %v1881 = vunpack.c.h.b16 %v1709
    %v1882 = vunpack.c.l.b16 %v1710
    %v1883 = vunpack.c.h.b16 %v1710
    %v1884 = vunpack.c.l.b16 %v1711
    %v1885 = vunpack.c.h.b16 %v1711
    %v1886 = vunpack.c.l.b16 %v1712
    %v1887 = vunpack.c.h.b16 %v1712
    %v1888 = vunpack.c.l.b16 %v1713
    %v1889 = vunpack.c.h.b16 %v1713
    %v1890 = vunpack.c.l.b16 %v1714
    %v1891 = vunpack.c.h.b16 %v1714
    %v1892 = vunpack.c.l.b16 %v1715
    %v1893 = vunpack.c.h.b16 %v1715
    %v1894 = vunpack.c.l.b16 %v1716
    %v1895 = vunpack.c.h.b16 %v1716
    %v1896 = vunpack.c.l.b16 %v1717
    %v1897 = vunpack.c.h.b16 %v1717
    %v1898 = vunpack.c.l.b16 %v1718
    %v1899 = vunpack.c.h.b16 %v1718
    %v1900 = vunpack.c.l.b16 %v1719
    %v1901 = vunpack.c.h.b16 %v1719
    %v1902 = vunpack.c.l.b16 %v1720
    %v1903 = vunpack.c.h.b16 %v1720
    %v1904 = vunpack.c.l.b16 %v1721
    %v1905 = vunpack.c.h.b16 %v1721
    %v1906 = vunpack.c.l.b16 %v1722
    %v1907 = vunpack.c.h.b16 %v1722
    %v1908 = vunpack.c.l.b16 %v1723
    %v1909 = vunpack.c.h.b16 %v1723
    %v1910 = vunpack.c.l.b16 %v1724
    %v1911 = vunpack.c.h.b16 %v1724
    %v1912 = vunpack.c.l.b16 %v1725
    %v1913 = vunpack.c.h.b16 %v1725
    %v1914 = vunpack.c.l.b16 %v1726
    %v1915 = vunpack.c.h.b16 %v1726
    %v1916 = vunpack.c.l.b16 %v1727
    %v1917 = vunpack.c.h.b16 %v1727
    %v1918 = vunpack.c.l.b16 %v1728
    %v1919 = vunpack.c.h.b16 %v1728
    %v1920 = vunpack.c.l.b16 %v1729
    %v1921 = vunpack.c.h.b16 %v1729
    %v1922 = vunpack.c.l.b16 %v1730
    %v1923 = vunpack.c.h.b16 %v1730
    %v1924 = vunpack.c.l.b16 %v1731
    %v1925 = vunpack.c.h.b16 %v1731
    %v1926 = vunpack.c.l.b16 %v1732
    %v1927 = vunpack.c.h.b16 %v1732
    %v1928 = vunpack.c.l.b16 %v1733
    %v1929 = vunpack.c.h.b16 %v1733
    %v1930 = vunpack.c.l.b16 %v1734
    %v1931 = vunpack.c.h.b16 %v1734
    %v1932 = vunpack.c.l.b16 %v1735
    %v1933 = vunpack.c.h.b16 %v1735
    %v1934 = vunpack.c.l.b16 %v1736
    %v1935 = vunpack.c.h.b16 %v1736
    %v1936 = vunpack.c.l.b16 %v1737
    %v1937 = vunpack.c.h.b16 %v1737
    %v1938 = vunpack.c.l.b16 %v1738
    %v1939 = vunpack.c.h.b16 %v1738
    %v1940 = vunpack.c.l.b16 %v1739
    %v1941 = vunpack.c.h.b16 %v1739
    %v1942 = vunpack.c.l.b16 %v1740
    %v1943 = vunpack.c.h.b16 %v1740
    %v1944 = vunpack.c.l.b16 %v1741
    %v1945 = vunpack.c.h.b16 %v1741
    %v1946 = vpack.c.b16 %v1820, %v1818
    %v1947 = vpack.c.b16 %v1821, %v1819
    %v1948 = vpack.c.b16 %v1824, %v1822
    %v1949 = vpack.c.b16 %v1825, %v1823
    %v1950 = vpack.c.b16 %v1828, %v1826
    %v1951 = vpack.c.b16 %v1829, %v1827
    %v1952 = vpack.c.b16 %v1832, %v1830
    %v1953 = vpack.c.b16 %v1833, %v1831
    %v1954 = vpack.c.b16 %v1836, %v1834
    %v1955 = vpack.c.b16 %v1837, %v1835
    %v1956 = vpack.c.b16 %v1840, %v1838
    %v1957 = vpack.c.b16 %v1841, %v1839
    %v1958 = vpack.c.b16 %v1844, %v1842
    %v1959 = vpack.c.b16 %v1845, %v1843
    %v1960 = vpack.c.b16 %v1848, %v1846
    %v1961 = vpack.c.b16 %v1849, %v1847
    %v1962 = vpack.c.b16 %v1852, %v1850
    %v1963 = vpack.c.b16 %v1853, %v1851
    %v1964 = vpack.c.b16 %v1856, %v1854
    %v1965 = vpack.c.b16 %v1857, %v1855
    %v1966 = vpack.c.b16 %v1860, %v1858
    %v1967 = vpack.c.b16 %v1861, %v1859
    %v1968 = vpack.c.b16 %v1864, %v1862
    %v1969 = vpack.c.b16 %v1865, %v1863
    %v1970 = vpack.c.b16 %v1868, %v1866
    %v1971 = vpack.c.b16 %v1869, %v1867
    %v1972 = vpack.c.b16 %v1872, %v1870
    %v1973 = vpack.c.b16 %v1873, %v1871
    %v1974 = vpack.c.b16 %v1876, %v1874
    %v1975 = vpack.c.b16 %v1877, %v1875
    %v1976 = vpack.c.b16 %v1880, %v1878
    %v1977 = vpack.c.b16 %v1881, %v1879
    %v1978 = vpack.c.b16 %v1884, %v1882
    %v1979 = vpack.c.b16 %v1885, %v1883
    %v1980 = vpack.c.b16 %v1888, %v1886
    %v1981 = vpack.c.b16 %v1889, %v1887
    %v1982 = vpack.c.b16 %v1892, %v1890
    %v1983 = vpack.c.b16 %v1893, %v1891
    %v1984 = vpack.c.b16 %v1896, %v1894
    %v1985 = vpack.c.b16 %v1897, %v1895
    %v1986 = vpack.c.b16 %v1900, %v1898
    %v1987 = vpack.c.b16 %v1901, %v1899
    %v1988 = vpack.c.b16 %v1904, %v1902
    %v1989 = vpack.c.b16 %v1905, %v1903
    %v1990 = vpack.c.b16 %v1908, %v1906
    %v1991 = vpack.c.b16 %v1909, %v1907
    %v1992 = vpack.c.b16 %v1912, %v1910
    %v1993 = vpack.c.b16 %v1913, %v1911
    %v1994 = vpack.c.b16 %v1916, %v1914
    %v1995 = vpack.c.b16 %v1917, %v1915
    %v1996 = vpack.c.b16 %v1920, %v1918
    %v1997 = vpack.c.b16 %v1921, %v1919
    %v1998 = vpack.c.b16 %v1924, %v1922
    %v1999 = vpack.c.b16 %v1925, %v1923
    %v2000 = vpack.c.b16 %v1928, %v1926
    %v2001 = vpack.c.b16 %v1929, %v1927
    %v2002 = vpack.c.b16 %v1932, %v1930
    %v2003 = vpack.c.b16 %v1933, %v1931
    %v2004 = vpack.c.b16 %v1936, %v1934
    %v2005 = vpack.c.b16 %v1937, %v1935
    %v2006 = vpack.c.b16 %v1940, %v1938
    %v2007 = vpack.c.b16 %v1941, %v1939
    %v2008 = vpack.c.b16 %v1944, %v1942
    %v2009 = vpack.c.b16 %v1945, %v1943
    %2074 = vmatprep.subr.bf16.mxu0 %v1947
    %2075 = vmatpush1.bf16.msra.mxu0 %v1946
    %2076 = vmatprep.subr.bf16.mxu0 %v1949
    %2077 = vmatpush1.bf16.msra.mxu0 %v1948
    %2078 = vmatprep.subr.bf16.mxu0 %v1951
    %2079 = vmatpush1.bf16.msra.mxu0 %v1950
    %2080 = vmatprep.subr.bf16.mxu0 %v1953
    %2081 = vmatpush1.bf16.msra.mxu0 %v1952
    %2082 = vmatprep.subr.bf16.mxu0 %v1955
    %2083 = vmatpush1.bf16.msra.mxu0 %v1954
    %2084 = vmatprep.subr.bf16.mxu0 %v1957
    %2085 = vmatpush1.bf16.msra.mxu0 %v1956
    %2086 = vmatprep.subr.bf16.mxu0 %v1959
    %2087 = vmatpush1.bf16.msra.mxu0 %v1958
    %2088 = vmatprep.subr.bf16.mxu0 %v1961
    %2089 = vmatpush1.bf16.msra.mxu0 %v1960
    %2090 = vmatprep.subr.bf16.mxu0 %v1963
    %2091 = vmatpush1.bf16.msra.mxu0 %v1962
    %2092 = vmatprep.subr.bf16.mxu0 %v1965
    %2093 = vmatpush1.bf16.msra.mxu0 %v1964
    %2094 = vmatprep.subr.bf16.mxu0 %v1967
    %2095 = vmatpush1.bf16.msra.mxu0 %v1966
    %2096 = vmatprep.subr.bf16.mxu0 %v1969
    %2097 = vmatpush1.bf16.msra.mxu0 %v1968
    %2098 = vmatprep.subr.bf16.mxu0 %v1971
    %2099 = vmatpush1.bf16.msra.mxu0 %v1970
    %2100 = vmatprep.subr.bf16.mxu0 %v1973
    %2101 = vmatpush1.bf16.msra.mxu0 %v1972
    %2102 = vmatprep.subr.bf16.mxu0 %v1975
    %2103 = vmatpush1.bf16.msra.mxu0 %v1974
    %2104 = vmatprep.subr.bf16.mxu0 %v1977
    %2105 = vmatpush1.bf16.msra.mxu0 %v1976
    %2106 = vmatprep.mubr.bf16.mxu0 %v1675
    %2107 = vmatmul.mubr.bf16.gmra.mrb[0].mxu0 %v1674
    %v2108 = vpop.f32.mrb[0].mxu0
    %v2109 = vadd.f32 %v1747, %v2108
    %v2110 = vpop.f32.mrb[0].mxu0
    %v2111 = vadd.f32 %v1751, %v2110
    %v2112 = vpop.f32.mrb[0].mxu0
    %v2113 = vadd.f32 %v1747, %v2112
    %v2114 = vpop.f32.mrb[0].mxu0
    %v2115 = vadd.f32 %v1751, %v2114
    %2116 = vdwg.mxu0
    %2117 = vmatprep.subr.bf16.mxu0 %v1979
    %2118 = vmatpush1.bf16.msra.mxu0 %v1978
    %2119 = vmatprep.subr.bf16.mxu0 %v1981
    %2120 = vmatpush1.bf16.msra.mxu0 %v1980
    %2121 = vmatprep.subr.bf16.mxu0 %v1983
    %2122 = vmatpush1.bf16.msra.mxu0 %v1982
    %2123 = vmatprep.subr.bf16.mxu0 %v1985
    %2124 = vmatpush1.bf16.msra.mxu0 %v1984
    %2125 = vmatprep.subr.bf16.mxu0 %v1987
    %2126 = vmatpush1.bf16.msra.mxu0 %v1986
    %2127 = vmatprep.subr.bf16.mxu0 %v1989
    %2128 = vmatpush1.bf16.msra.mxu0 %v1988
    %2129 = vmatprep.subr.bf16.mxu0 %v1991
    %2130 = vmatpush1.bf16.msra.mxu0 %v1990
    %2131 = vmatprep.subr.bf16.mxu0 %v1993
    %2132 = vmatpush1.bf16.msra.mxu0 %v1992
    %2133 = vmatprep.subr.bf16.mxu0 %v1995
    %2134 = vmatpush1.bf16.msra.mxu0 %v1994
    %2135 = vmatprep.subr.bf16.mxu0 %v1997
    %2136 = vmatpush1.bf16.msra.mxu0 %v1996
    %2137 = vmatprep.subr.bf16.mxu0 %v1999
    %2138 = vmatpush1.bf16.msra.mxu0 %v1998
    %2139 = vmatprep.subr.bf16.mxu0 %v2001
    %2140 = vmatpush1.bf16.msra.mxu0 %v2000
    %2141 = vmatprep.subr.bf16.mxu0 %v2003
    %2142 = vmatpush1.bf16.msra.mxu0 %v2002
    %2143 = vmatprep.subr.bf16.mxu0 %v2005
    %2144 = vmatpush1.bf16.msra.mxu0 %v2004
    %2145 = vmatprep.subr.bf16.mxu0 %v2007
    %2146 = vmatpush1.bf16.msra.mxu0 %v2006
    %2147 = vmatprep.subr.bf16.mxu0 %v2009
    %2148 = vmatpush1.bf16.msra.mxu0 %v2008
    %2149 = vmatprep.mubr.bf16.mxu0 %v1677
    %2150 = vmatmul.mubr.bf16.gmra.mrb[0].mxu0 %v1676
    %v2151 = vpop.f32.mrb[0].mxu0
    %v2152 = vadd.f32 %v2109, %v2151
    %v2153 = vpop.f32.mrb[0].mxu0
    %v2154 = vadd.f32 %v2111, %v2153
    %v2155 = vpop.f32.mrb[0].mxu0
    %v2156 = vadd.f32 %v2113, %v2155
    %v2157 = vpop.f32.mrb[0].mxu0
    %v2158 = vadd.f32 %v2115, %v2157
    %2159 = vdwg.mxu0
    %vm2160 = vcmp.gt.f32.partialorder %v2152, 0.0
    %vm2161 = vcmp.gt.f32.partialorder %v2154, 0.0
    %vm2162 = vcmp.gt.f32.partialorder %v2156, 0.0
    %vm2163 = vcmp.gt.f32.partialorder %v2158, 0.0
    %v2164 = vmul.f32 %v2152, 0.01
    %v2165 = vmul.f32 %v2154, 0.01
    %v2166 = vmul.f32 %v2156, 0.01
    %v2167 = vmul.f32 %v2158, 0.01
    %v2168 = vsel %vm2160, %v2152, %v2164
    %v2169 = vsel %vm2161, %v2154, %v2165
    %v2170 = vsel %vm2162, %v2156, %v2166
    %v2171 = vsel %vm2163, %v2158, %v2167
    %v2172 = vpack.c.bf16 %v2170, %v2168
    %v2173 = vpack.c.bf16 %v2171, %v2169
    %v2174 = vld [vmem:[#allocation8] sm:$0xf]
    %v2175 = vld [vmem:[#allocation8 + $0x4] sm:$0xf]
    %v2176 = vld [vmem:[#allocation8 + $0x8] sm:$0xf]
    %v2177 = vld [vmem:[#allocation8 + $0xc] sm:$0xf]
    %v2178 = vld [vmem:[#allocation8 + $0x10] sm:$0xf]
    %v2179 = vld [vmem:[#allocation8 + $0x14] sm:$0xf]
    %v2180 = vld [vmem:[#allocation8 + $0x18] sm:$0xf]
    %v2181 = vld [vmem:[#allocation8 + $0x1c] sm:$0xf]
    %v2182 = vld [vmem:[#allocation8 + $0x20] sm:$0xf]
    %v2183 = vld [vmem:[#allocation8 + $0x24] sm:$0xf]
    %v2184 = vld [vmem:[#allocation8 + $0x28] sm:$0xf]
    %v2185 = vld [vmem:[#allocation8 + $0x2c] sm:$0xf]
    %v2186 = vld [vmem:[#allocation8 + $0x30] sm:$0xf]
    %v2187 = vld [vmem:[#allocation8 + $0x34] sm:$0xf]
    %v2188 = vld [vmem:[#allocation8 + $0x38] sm:$0xf]
    %v2189 = vld [vmem:[#allocation8 + $0x3c] sm:$0xf]
    %v2190 = vld [vmem:[#allocation8 + $0x40] sm:$0xf]
    %v2191 = vld [vmem:[#allocation8 + $0x44] sm:$0xf]
    %v2192 = vld [vmem:[#allocation8 + $0x48] sm:$0xf]
    %v2193 = vld [vmem:[#allocation8 + $0x4c] sm:$0xf]
    %v2194 = vld [vmem:[#allocation8 + $0x50] sm:$0xf]
    %v2195 = vld [vmem:[#allocation8 + $0x54] sm:$0xf]
    %v2196 = vld [vmem:[#allocation8 + $0x58] sm:$0xf]
    %v2197 = vld [vmem:[#allocation8 + $0x5c] sm:$0xf]
    %v2198 = vld [vmem:[#allocation8 + $0x60] sm:$0xf]
    %v2199 = vld [vmem:[#allocation8 + $0x64] sm:$0xf]
    %v2200 = vld [vmem:[#allocation8 + $0x68] sm:$0xf]
    %v2201 = vld [vmem:[#allocation8 + $0x6c] sm:$0xf]
    %v2202 = vld [vmem:[#allocation8 + $0x70] sm:$0xf]
    %v2203 = vld [vmem:[#allocation8 + $0x74] sm:$0xf]
    %v2204 = vld [vmem:[#allocation8 + $0x78] sm:$0xf]
    %v2205 = vld [vmem:[#allocation8 + $0x7c] sm:$0xf]
    %v2206 = vld [vmem:[%s6] sm:$0x1]
    %v2208 = vlaneseq
    %v2209 = vshrl.u32 %v2208, 7
    %v2210 = vsub.s32 0, %v2209
    %v2211 = vrot.slane %v2206, %v2210
    %v2245 = vunpack.c.l.b16 %v2174
    %v2246 = vunpack.c.l.b16 %v2175
    %v2247 = vunpack.c.l.b16 %v2176
    %v2248 = vunpack.c.l.b16 %v2177
    %v2249 = vunpack.c.l.b16 %v2178
    %v2250 = vunpack.c.l.b16 %v2179
    %v2251 = vunpack.c.l.b16 %v2180
    %v2252 = vunpack.c.l.b16 %v2181
    %v2253 = vunpack.c.l.b16 %v2182
    %v2254 = vunpack.c.l.b16 %v2183
    %v2255 = vunpack.c.l.b16 %v2184
    %v2256 = vunpack.c.l.b16 %v2185
    %v2257 = vunpack.c.l.b16 %v2186
    %v2258 = vunpack.c.l.b16 %v2187
    %v2259 = vunpack.c.l.b16 %v2188
    %v2260 = vunpack.c.l.b16 %v2189
    %v2261 = vunpack.c.l.b16 %v2190
    %v2262 = vunpack.c.l.b16 %v2191
    %v2263 = vunpack.c.l.b16 %v2192
    %v2264 = vunpack.c.l.b16 %v2193
    %v2265 = vunpack.c.l.b16 %v2194
    %v2266 = vunpack.c.l.b16 %v2195
    %v2267 = vunpack.c.l.b16 %v2196
    %v2268 = vunpack.c.l.b16 %v2197
    %v2269 = vunpack.c.l.b16 %v2198
    %v2270 = vunpack.c.l.b16 %v2199
    %v2271 = vunpack.c.l.b16 %v2200
    %v2272 = vunpack.c.l.b16 %v2201
    %v2273 = vunpack.c.l.b16 %v2202
    %v2274 = vunpack.c.l.b16 %v2203
    %v2275 = vunpack.c.l.b16 %v2204
    %v2276 = vunpack.c.l.b16 %v2205
    %v2277 = vpack.c.b16 %v2246, %v2245
    %v2278 = vpack.c.b16 %v2248, %v2247
    %v2279 = vpack.c.b16 %v2250, %v2249
    %v2280 = vpack.c.b16 %v2252, %v2251
    %v2281 = vpack.c.b16 %v2254, %v2253
    %v2282 = vpack.c.b16 %v2256, %v2255
    %v2283 = vpack.c.b16 %v2258, %v2257
    %v2284 = vpack.c.b16 %v2260, %v2259
    %v2285 = vpack.c.b16 %v2262, %v2261
    %v2286 = vpack.c.b16 %v2264, %v2263
    %v2287 = vpack.c.b16 %v2266, %v2265
    %v2288 = vpack.c.b16 %v2268, %v2267
    %v2289 = vpack.c.b16 %v2270, %v2269
    %v2290 = vpack.c.b16 %v2272, %v2271
    %v2291 = vpack.c.b16 %v2274, %v2273
    %v2292 = vpack.c.b16 %v2276, %v2275
    %2309 = vmatprep.subr.bf16.mxu0 0
    %2310 = vmatpush1.bf16.msra.mxu0 %v2277
    %2311 = vmatprep.subr.bf16.mxu0 0
    %2312 = vmatpush1.bf16.msra.mxu0 %v2278
    %2313 = vmatprep.subr.bf16.mxu0 0
    %2314 = vmatpush1.bf16.msra.mxu0 %v2279
    %2315 = vmatprep.subr.bf16.mxu0 0
    %2316 = vmatpush1.bf16.msra.mxu0 %v2280
    %2317 = vmatprep.subr.bf16.mxu0 0
    %2318 = vmatpush1.bf16.msra.mxu0 %v2281
    %2319 = vmatprep.subr.bf16.mxu0 0
    %2320 = vmatpush1.bf16.msra.mxu0 %v2282
    %2321 = vmatprep.subr.bf16.mxu0 0
    %2322 = vmatpush1.bf16.msra.mxu0 %v2283
    %2323 = vmatprep.subr.bf16.mxu0 0
    %2324 = vmatpush1.bf16.msra.mxu0 %v2284
    %2325 = vmatprep.subr.bf16.mxu0 0
    %2326 = vmatpush1.bf16.msra.mxu0 %v2285
    %2327 = vmatprep.subr.bf16.mxu0 0
    %2328 = vmatpush1.bf16.msra.mxu0 %v2286
    %2329 = vmatprep.subr.bf16.mxu0 0
    %2330 = vmatpush1.bf16.msra.mxu0 %v2287
    %2331 = vmatprep.subr.bf16.mxu0 0
    %2332 = vmatpush1.bf16.msra.mxu0 %v2288
    %2333 = vmatprep.subr.bf16.mxu0 0
    %2334 = vmatpush1.bf16.msra.mxu0 %v2289
    %2335 = vmatprep.subr.bf16.mxu0 0
    %2336 = vmatpush1.bf16.msra.mxu0 %v2290
    %2337 = vmatprep.subr.bf16.mxu0 0
    %2338 = vmatpush1.bf16.msra.mxu0 %v2291
    %2339 = vmatprep.subr.bf16.mxu0 0
    %2340 = vmatpush1.bf16.msra.mxu0 %v2292
    %2341 = vmatprep.mubr.bf16.mxu0 %v2173
    %2342 = vmatmul.mubr.bf16.gmra.mrb[0].mxu0 %v2172
    %v2343 = vpop.f32.mrb[0].mxu0
    %v2344 = vadd.f32 %v2211, %v2343
    %v2345 = vpop.f32.mrb[0].mxu0
    %v2346 = vpop.f32.mrb[0].mxu0
    %v2347 = vadd.f32 %v2211, %v2346
    %v2348 = vpop.f32.mrb[0].mxu0
    %2349 = vdwg.mxu0
    %v2350 = vand.u32 2147483647, %v2344
    %v2351 = vand.u32 2147483647, %v2347
    %v2352 = vsub.f32 0.0, %v2350
    %v2353 = vsub.f32 0.0, %v2351
    %v2354 = vmul.f32 %v2352, 1.442695
    %v2355 = vpow.pop %v2354
    %v2356 = vmul.f32 %v2353, 1.442695
    %v2357 = vpow.pop %v2356
    %v2358 = vadd.f32 %v2355, 1.0
    %v2359 = vadd.f32 %v2357, 1.0
    %v2360 = vrcp.pop %v2358
    %v2361 = vrcp.pop %v2359
    %vm2362 = vcmp.ge.f32.partialorder %v2344, 0.0
    %vm2363 = vcmp.ge.f32.partialorder %v2347, 0.0
    %v2364 = vmul.f32 %v2355, %v2360
    %v2365 = vmul.f32 %v2357, %v2361
    %v2366 = vsel %vm2362, %v2360, %v2364
    %v2367 = vsel %vm2363, %v2361, %v2365
    %v2368 = vpack.c.bf16 %v2367, %v2366
    %v2370 = vunpack.c.l.b16 %v2368
    %v2371 = vunpack.c.h.b16 %v2368
    %v2372 = vpack.c.b16 %v2370, %v2370
    %v2373 = vpack.c.b16 %v2371, %v2371
    %2376 = vst [vmem:[#allocation10] sm:$0xf] %v2372
    %2377 = vst [vmem:[#allocation10 + $0x4] sm:$0xf] %v2373
    // Predicated region
    $region46: #{tpu_custom_call.1} parent=1 // pred_check
      _
    $region47: #{tpu_custom_call.1} parent=1 // pred_check_branch
      %2379 = sbr.rel (0) target = $region49
    $region48: #{tpu_custom_call.1} parent=1 // pred_region
      %s2381 = ssub.s32 128, 128
      %2382 = vsyncadd [#allocation4], %s2381
      %s2383 = sshll.u32 [#allocation10], 4
      %s2384 = int_to_ptr.vmem [resolvable:$true] %s2383
      %2389 = dma.vmem_to_hbm [thread:$0]  %s2384, 128, %s7, [#allocation4], 64, 64, 4
    $region49: #{tpu_custom_call.1} parent=1 // pred_fallthru
      _
    // Predicated region
    $region50: #{tpu_custom_call.1} parent=1 // pred_check
      _
    $region51: #{tpu_custom_call.1} parent=1 // pred_check_branch
      %2391 = sbr.rel (0) target = $region53
    $region52: #{tpu_custom_call.1} parent=1 // pred_region
      %2392 = dma.done [#allocation4], 128
    $region53: #{tpu_custom_call.1} parent=1 // pred_fallthru
      _
    %2393 = vsyncpa [#allocation3], 1
    %2394 = vsyncpa [#allocation6], 1
    %2395 = vsyncpa [#allocation9], 1
    %2396 = vsyncpa [#allocation4], 1

</llo_original>
